<compile_context>
chip_gen: v7x
topology: tpu7x:2x2x1
jax: 0.10.0
libtpu: 0.0.40
codegen_flags: <defaults>
</compile_context>

<pallas_src>
import jax
import jax.numpy as jnp
from jax.experimental import pallas as pl
from jax.experimental.pallas import tpu as pltpu

# ----------------------------- config (small) -----------------------------
VOCAB_SIZE = 50
EMBED_DIM = 32
HIDDEN_DIM = 32
OUTPUT_DIM = 1
N_LAYERS = 2
BATCH = 2
SEQ = 8


# ------------------------------ fused kernel -------------------------------
def _modified_rnn_kernel(ids_ref, emb_ref,
                         w0_ref, b0_ref, w1_ref, b1_ref,
                         fw1_ref, fb1_ref, fw2_ref, fb2_ref,
                         out_ref):
    """Embedding -> 2x bidirectional LSTM layers -> Linear/ReLU/Linear head."""
    S, B = ids_ref.shape              # token ids, SMEM, [S, B] int32
    E = emb_ref.shape[2]              # embedding dim
    H = b0_ref.shape[1] // 8          # hidden dim (bias is [1, 8H])
    H2 = 2 * H

    # --- embedding gather (token ids in SMEM -> rows of VMEM table) ---
    def embed_at(t):
        rows = [emb_ref[ids_ref[t, b]] for b in range(B)]   # each (1, E)
        return jnp.concatenate(rows, axis=0)                # (B, E)

    x_emb = [embed_at(t) for t in range(S)]                 # layer-0 inputs

    # --- one bidirectional LSTM layer, both directions fused per step ---
    # Weight layout: rows = [x_fwd(D); h_fwd(H); x_bwd(D); h_bwd(H)]
    #                cols = [i_f,i_b, f_f,f_b, g_f,g_b, o_f,o_b], each H wide.
    # State layout:  h = [h_fwd | h_bwd], c = [c_fwd | c_bwd]  (B, 2H).
    def bidir_layer(get_x, w_ref, b_ref):
        h = jnp.zeros((B, H2), jnp.float32)
        c = jnp.zeros((B, H2), jnp.float32)
        outs_f = [None] * S
        outs_b = [None] * S
        for t in range(S):
            x_f = get_x(t)            # forward reads position t
            x_b = get_x(S - 1 - t)    # backward reads position S-1-t
            inp = jnp.concatenate([x_f, h[:, :H], x_b, h[:, H:]], axis=1)
            gates = jnp.dot(inp, w_ref[...],
                            preferred_element_type=jnp.float32) + b_ref[...]
            sg = jax.nn.sigmoid(gates)        # one full-width sigmoid
            th = jnp.tanh(gates)              # one full-width tanh
            i = sg[:, 0 * H2:1 * H2]
            f = sg[:, 1 * H2:2 * H2]
            g = th[:, 2 * H2:3 * H2]
            o = sg[:, 3 * H2:4 * H2]
            c = f * c + i * g
            h = o * jnp.tanh(c)
            outs_f[t] = h[:, :H]              # fwd hidden at position t
            outs_b[S - 1 - t] = h[:, H:]      # bwd hidden at position S-1-t
        return h, outs_f, outs_b              # final h = [hN_fwd | hN_bwd]

    # layer 0
    _, o0f, o0b = bidir_layer(lambda t: x_emb[t], w0_ref, b0_ref)
    l0_out = [jnp.concatenate([o0f[t], o0b[t]], axis=1) for t in range(S)]

    # layer 1 (inter-layer dropout: eval-mode identity)
    h_final, _, _ = bidir_layer(lambda t: l0_out[t], w1_ref, b1_ref)

    # hidden = cat(hidden[-2], hidden[-1]) == [hN_fwd | hN_bwd] of last layer;
    # dropout(hidden): eval-mode identity.
    z = jnp.dot(h_final, fw1_ref[...],
                preferred_element_type=jnp.float32) + fb1_ref[...]
    z = jnp.maximum(z, 0.0)                                       # ReLU
    out_ref[...] = jnp.dot(z, fw2_ref[...],
                           preferred_element_type=jnp.float32) + fb2_ref[...]


# ------------------------------ forward pass --------------------------------
def modified_rnn_forward(text, params):
    """text: [B, S] int32 token ids -> logits [B, OUTPUT_DIM]."""
    ids = text.T.astype(jnp.int32)                                   # [S, B]
    S, B = ids.shape
    # leading-axis-gather layout for the embedding table
    emb3 = params["embedding"].reshape(VOCAB_SIZE, 1, EMBED_DIM)

    smem_spec = pl.BlockSpec(memory_space=pltpu.MemorySpace.SMEM)
    vmem_specs = [pl.BlockSpec(memory_space=pltpu.MemorySpace.VMEM)
                  for _ in range(9)]

    return pl.pallas_call(
        _modified_rnn_kernel,
        out_shape=jax.ShapeDtypeStruct((B, OUTPUT_DIM), jnp.float32),
        in_specs=[smem_spec] + vmem_specs,
        out_specs=pl.BlockSpec(memory_space=pltpu.MemorySpace.VMEM),
    )(ids, emb3,
      params["W0"], params["b0"], params["W1"], params["b1"],
      params["fc_w1"], params["fc_b1"], params["fc_w2"], params["fc_b2"])


# --------------------- weight fusion (done once at init) --------------------
def _fuse_bidir_weights(wih_t_f, whh_t_f, b_f, wih_t_b, whh_t_b, b_b, hidden):
    """Build block-diagonal [2(D+H), 8H] weight + [1, 8H] bias with gate
    columns interleaved as [i_f,i_b, f_f,f_b, g_f,g_b, o_f,o_b]."""
    H = hidden
    rows_f = jnp.concatenate([wih_t_f, whh_t_f], axis=0)      # (D+H, 4H)
    rows_b = jnp.concatenate([wih_t_b, whh_t_b], axis=0)      # (D+H, 4H)
    top = jnp.concatenate([rows_f, jnp.zeros_like(rows_f)], axis=1)
    bot = jnp.concatenate([jnp.zeros_like(rows_b), rows_b], axis=1)
    w = jnp.concatenate([top, bot], axis=0)                   # (2(D+H), 8H)
    b = jnp.concatenate([b_f, b_b], axis=1)                   # (1, 8H)

    def reorder(m):                     # [fwd gates | bwd gates] -> interleave
        blocks = []
        for gate in range(4):                                  # i, f, g, o
            blocks.append(m[:, gate * H:(gate + 1) * H])       # fwd gate
            blocks.append(m[:, (4 + gate) * H:(5 + gate) * H]) # bwd gate
        return jnp.concatenate(blocks, axis=1)

    return reorder(w), reorder(b)


# ------------------------------ parameter init ------------------------------
def init_params(key):
    params = {}
    bound = 1.0 / jnp.sqrt(HIDDEN_DIM)

    def uni(k, shape, b=bound):
        return jax.random.uniform(k, shape, jnp.float32, -b, b)

    keys = jax.random.split(key, 32)
    ki = iter(range(32))

    params["embedding"] = jax.random.normal(keys[next(ki)],
                                            (VOCAB_SIZE, EMBED_DIM), jnp.float32)

    for layer in range(N_LAYERS):
        in_dim = EMBED_DIM if layer == 0 else 2 * HIDDEN_DIM
        dirs = {}
        for direction in ("fwd", "bwd"):
            wih_t = uni(keys[next(ki)], (in_dim, 4 * HIDDEN_DIM))       # W_ih^T
            whh_t = uni(keys[next(ki)], (HIDDEN_DIM, 4 * HIDDEN_DIM))   # W_hh^T
            b_ih = uni(keys[next(ki)], (1, 4 * HIDDEN_DIM))
            b_hh = uni(keys[next(ki)], (1, 4 * HIDDEN_DIM))
            dirs[direction] = (wih_t, whh_t, b_ih + b_hh)   # fold the 2 biases
        W, b = _fuse_bidir_weights(*dirs["fwd"], *dirs["bwd"], HIDDEN_DIM)
        params[f"W{layer}"] = W
        params[f"b{layer}"] = b

    fc_b1 = 1.0 / jnp.sqrt(2 * HIDDEN_DIM)
    fc_b2 = 1.0 / jnp.sqrt(HIDDEN_DIM)
    params["fc_w1"] = uni(keys[next(ki)], (2 * HIDDEN_DIM, HIDDEN_DIM), fc_b1)
    params["fc_b1"] = uni(keys[next(ki)], (1, HIDDEN_DIM), fc_b1)
    params["fc_w2"] = uni(keys[next(ki)], (HIDDEN_DIM, OUTPUT_DIM), fc_b2)
    params["fc_b2"] = uni(keys[next(ki)], (1, OUTPUT_DIM), fc_b2)
    return params


# ---------------------------------- main -------------------------------------
if __name__ == "__main__":
    key = jax.random.PRNGKey(0)
    k_param, k_text = jax.random.split(key)

    params = init_params(k_param)
    text = jax.random.randint(k_text, (BATCH, SEQ), 0, VOCAB_SIZE, dtype=jnp.int32)

    fwd = jax.jit(modified_rnn_forward)
    logits = fwd(text, params)
    jax.block_until_ready(logits)

    assert logits.shape == (BATCH, OUTPUT_DIM)
    assert logits.dtype == jnp.float32
    assert bool(jnp.all(jnp.isfinite(logits)))
    print("KERNEL_OK")
</pallas_src>

<mosaic_0001>
module attributes {stable_mosaic.version = 11 : i64} {
  func.func @_modified_rnn_kernel(%arg0: memref<8x2xi32, #tpu.memory_space<smem>>, %arg1: memref<50x1x32xf32, #tpu.memory_space<vmem>>, %arg2: memref<128x256xf32, #tpu.memory_space<vmem>>, %arg3: memref<1x256xf32, #tpu.memory_space<vmem>>, %arg4: memref<192x256xf32, #tpu.memory_space<vmem>>, %arg5: memref<1x256xf32, #tpu.memory_space<vmem>>, %arg6: memref<64x32xf32, #tpu.memory_space<vmem>>, %arg7: memref<1x32xf32, #tpu.memory_space<vmem>>, %arg8: memref<32x1xf32, #tpu.memory_space<vmem>>, %arg9: memref<1x1xf32, #tpu.memory_space<vmem>>, %arg10: memref<2x1xf32, #tpu.memory_space<vmem>>) attributes {dimension_semantics = [], scalar_prefetch = 0 : i64, scratch_operands = 0 : i64, tpu.core_type = #tpu.core_type<tc>} {
    %c0 = arith.constant 0 : index
    %c0_0 = arith.constant 0 : index
    %0 = memref.load %arg0[%c0, %c0_0] : memref<8x2xi32, #tpu.memory_space<smem>>
    %1 = arith.index_cast %0 : i32 to index
    %c0_1 = arith.constant 0 : index
    %c0_2 = arith.constant 0 : index
    %2 = vector.load %arg1[%1, %c0_1, %c0_2] : memref<50x1x32xf32, #tpu.memory_space<vmem>>, vector<1x1x32xf32>
    %3 = vector.shape_cast %2 : vector<1x1x32xf32> to vector<1x32xf32>
    %c0_3 = arith.constant 0 : index
    %c1 = arith.constant 1 : index
    %4 = memref.load %arg0[%c0_3, %c1] : memref<8x2xi32, #tpu.memory_space<smem>>
    %5 = arith.index_cast %4 : i32 to index
    %c0_4 = arith.constant 0 : index
    %c0_5 = arith.constant 0 : index
    %6 = vector.load %arg1[%5, %c0_4, %c0_5] : memref<50x1x32xf32, #tpu.memory_space<vmem>>, vector<1x1x32xf32>
    %7 = vector.shape_cast %6 : vector<1x1x32xf32> to vector<1x32xf32>
    %8 = tpu.concatenate %3, %7 in 0 : vector<1x32xf32>, vector<1x32xf32> -> vector<2x32xf32>
    %c1_6 = arith.constant 1 : index
    %c0_7 = arith.constant 0 : index
    %9 = memref.load %arg0[%c1_6, %c0_7] : memref<8x2xi32, #tpu.memory_space<smem>>
    %10 = arith.index_cast %9 : i32 to index
    %c0_8 = arith.constant 0 : index
    %c0_9 = arith.constant 0 : index
    %11 = vector.load %arg1[%10, %c0_8, %c0_9] : memref<50x1x32xf32, #tpu.memory_space<vmem>>, vector<1x1x32xf32>
    %12 = vector.shape_cast %11 : vector<1x1x32xf32> to vector<1x32xf32>
    %c1_10 = arith.constant 1 : index
    %c1_11 = arith.constant 1 : index
    %13 = memref.load %arg0[%c1_10, %c1_11] : memref<8x2xi32, #tpu.memory_space<smem>>
    %14 = arith.index_cast %13 : i32 to index
    %c0_12 = arith.constant 0 : index
    %c0_13 = arith.constant 0 : index
    %15 = vector.load %arg1[%14, %c0_12, %c0_13] : memref<50x1x32xf32, #tpu.memory_space<vmem>>, vector<1x1x32xf32>
    %16 = vector.shape_cast %15 : vector<1x1x32xf32> to vector<1x32xf32>
    %17 = tpu.concatenate %12, %16 in 0 : vector<1x32xf32>, vector<1x32xf32> -> vector<2x32xf32>
    %c2 = arith.constant 2 : index
    %c0_14 = arith.constant 0 : index
    %18 = memref.load %arg0[%c2, %c0_14] : memref<8x2xi32, #tpu.memory_space<smem>>
    %19 = arith.index_cast %18 : i32 to index
    %c0_15 = arith.constant 0 : index
    %c0_16 = arith.constant 0 : index
    %20 = vector.load %arg1[%19, %c0_15, %c0_16] : memref<50x1x32xf32, #tpu.memory_space<vmem>>, vector<1x1x32xf32>
    %21 = vector.shape_cast %20 : vector<1x1x32xf32> to vector<1x32xf32>
    %c2_17 = arith.constant 2 : index
    %c1_18 = arith.constant 1 : index
    %22 = memref.load %arg0[%c2_17, %c1_18] : memref<8x2xi32, #tpu.memory_space<smem>>
    %23 = arith.index_cast %22 : i32 to index
    %c0_19 = arith.constant 0 : index
    %c0_20 = arith.constant 0 : index
    %24 = vector.load %arg1[%23, %c0_19, %c0_20] : memref<50x1x32xf32, #tpu.memory_space<vmem>>, vector<1x1x32xf32>
    %25 = vector.shape_cast %24 : vector<1x1x32xf32> to vector<1x32xf32>
    %26 = tpu.concatenate %21, %25 in 0 : vector<1x32xf32>, vector<1x32xf32> -> vector<2x32xf32>
    %c3 = arith.constant 3 : index
    %c0_21 = arith.constant 0 : index
    %27 = memref.load %arg0[%c3, %c0_21] : memref<8x2xi32, #tpu.memory_space<smem>>
    %28 = arith.index_cast %27 : i32 to index
    %c0_22 = arith.constant 0 : index
    %c0_23 = arith.constant 0 : index
    %29 = vector.load %arg1[%28, %c0_22, %c0_23] : memref<50x1x32xf32, #tpu.memory_space<vmem>>, vector<1x1x32xf32>
    %30 = vector.shape_cast %29 : vector<1x1x32xf32> to vector<1x32xf32>
    %c3_24 = arith.constant 3 : index
    %c1_25 = arith.constant 1 : index
    %31 = memref.load %arg0[%c3_24, %c1_25] : memref<8x2xi32, #tpu.memory_space<smem>>
    %32 = arith.index_cast %31 : i32 to index
    %c0_26 = arith.constant 0 : index
    %c0_27 = arith.constant 0 : index
    %33 = vector.load %arg1[%32, %c0_26, %c0_27] : memref<50x1x32xf32, #tpu.memory_space<vmem>>, vector<1x1x32xf32>
    %34 = vector.shape_cast %33 : vector<1x1x32xf32> to vector<1x32xf32>
    %35 = tpu.concatenate %30, %34 in 0 : vector<1x32xf32>, vector<1x32xf32> -> vector<2x32xf32>
    %c4 = arith.constant 4 : index
    %c0_28 = arith.constant 0 : index
    %36 = memref.load %arg0[%c4, %c0_28] : memref<8x2xi32, #tpu.memory_space<smem>>
    %37 = arith.index_cast %36 : i32 to index
    %c0_29 = arith.constant 0 : index
    %c0_30 = arith.constant 0 : index
    %38 = vector.load %arg1[%37, %c0_29, %c0_30] : memref<50x1x32xf32, #tpu.memory_space<vmem>>, vector<1x1x32xf32>
    %39 = vector.shape_cast %38 : vector<1x1x32xf32> to vector<1x32xf32>
    %c4_31 = arith.constant 4 : index
    %c1_32 = arith.constant 1 : index
    %40 = memref.load %arg0[%c4_31, %c1_32] : memref<8x2xi32, #tpu.memory_space<smem>>
    %41 = arith.index_cast %40 : i32 to index
    %c0_33 = arith.constant 0 : index
    %c0_34 = arith.constant 0 : index
    %42 = vector.load %arg1[%41, %c0_33, %c0_34] : memref<50x1x32xf32, #tpu.memory_space<vmem>>, vector<1x1x32xf32>
    %43 = vector.shape_cast %42 : vector<1x1x32xf32> to vector<1x32xf32>
    %44 = tpu.concatenate %39, %43 in 0 : vector<1x32xf32>, vector<1x32xf32> -> vector<2x32xf32>
    %c5 = arith.constant 5 : index
    %c0_35 = arith.constant 0 : index
    %45 = memref.load %arg0[%c5, %c0_35] : memref<8x2xi32, #tpu.memory_space<smem>>
    %46 = arith.index_cast %45 : i32 to index
    %c0_36 = arith.constant 0 : index
    %c0_37 = arith.constant 0 : index
    %47 = vector.load %arg1[%46, %c0_36, %c0_37] : memref<50x1x32xf32, #tpu.memory_space<vmem>>, vector<1x1x32xf32>
    %48 = vector.shape_cast %47 : vector<1x1x32xf32> to vector<1x32xf32>
    %c5_38 = arith.constant 5 : index
    %c1_39 = arith.constant 1 : index
    %49 = memref.load %arg0[%c5_38, %c1_39] : memref<8x2xi32, #tpu.memory_space<smem>>
    %50 = arith.index_cast %49 : i32 to index
    %c0_40 = arith.constant 0 : index
    %c0_41 = arith.constant 0 : index
    %51 = vector.load %arg1[%50, %c0_40, %c0_41] : memref<50x1x32xf32, #tpu.memory_space<vmem>>, vector<1x1x32xf32>
    %52 = vector.shape_cast %51 : vector<1x1x32xf32> to vector<1x32xf32>
    %53 = tpu.concatenate %48, %52 in 0 : vector<1x32xf32>, vector<1x32xf32> -> vector<2x32xf32>
    %c6 = arith.constant 6 : index
    %c0_42 = arith.constant 0 : index
    %54 = memref.load %arg0[%c6, %c0_42] : memref<8x2xi32, #tpu.memory_space<smem>>
    %55 = arith.index_cast %54 : i32 to index
    %c0_43 = arith.constant 0 : index
    %c0_44 = arith.constant 0 : index
    %56 = vector.load %arg1[%55, %c0_43, %c0_44] : memref<50x1x32xf32, #tpu.memory_space<vmem>>, vector<1x1x32xf32>
    %57 = vector.shape_cast %56 : vector<1x1x32xf32> to vector<1x32xf32>
    %c6_45 = arith.constant 6 : index
    %c1_46 = arith.constant 1 : index
    %58 = memref.load %arg0[%c6_45, %c1_46] : memref<8x2xi32, #tpu.memory_space<smem>>
    %59 = arith.index_cast %58 : i32 to index
    %c0_47 = arith.constant 0 : index
    %c0_48 = arith.constant 0 : index
    %60 = vector.load %arg1[%59, %c0_47, %c0_48] : memref<50x1x32xf32, #tpu.memory_space<vmem>>, vector<1x1x32xf32>
    %61 = vector.shape_cast %60 : vector<1x1x32xf32> to vector<1x32xf32>
    %62 = tpu.concatenate %57, %61 in 0 : vector<1x32xf32>, vector<1x32xf32> -> vector<2x32xf32>
    %c7 = arith.constant 7 : index
    %c0_49 = arith.constant 0 : index
    %63 = memref.load %arg0[%c7, %c0_49] : memref<8x2xi32, #tpu.memory_space<smem>>
    %64 = arith.index_cast %63 : i32 to index
    %c0_50 = arith.constant 0 : index
    %c0_51 = arith.constant 0 : index
    %65 = vector.load %arg1[%64, %c0_50, %c0_51] : memref<50x1x32xf32, #tpu.memory_space<vmem>>, vector<1x1x32xf32>
    %66 = vector.shape_cast %65 : vector<1x1x32xf32> to vector<1x32xf32>
    %c7_52 = arith.constant 7 : index
    %c1_53 = arith.constant 1 : index
    %67 = memref.load %arg0[%c7_52, %c1_53] : memref<8x2xi32, #tpu.memory_space<smem>>
    %68 = arith.index_cast %67 : i32 to index
    %c0_54 = arith.constant 0 : index
    %c0_55 = arith.constant 0 : index
    %69 = vector.load %arg1[%68, %c0_54, %c0_55] : memref<50x1x32xf32, #tpu.memory_space<vmem>>, vector<1x1x32xf32>
    %70 = vector.shape_cast %69 : vector<1x1x32xf32> to vector<1x32xf32>
    %71 = tpu.concatenate %66, %70 in 0 : vector<1x32xf32>, vector<1x32xf32> -> vector<2x32xf32>
    %cst = arith.constant 0.000000e+00 : f32
    %72 = vector.broadcast %cst : f32 to vector<2x64xf32>
    %cst_56 = arith.constant 0.000000e+00 : f32
    %73 = vector.broadcast %cst_56 : f32 to vector<2x64xf32>
    %74 = vector.extract_strided_slice %72 {offsets = [0, 0], sizes = [2, 32], strides = [1, 1]} : vector<2x64xf32> to vector<2x32xf32>
    %75 = vector.extract_strided_slice %72 {offsets = [0, 32], sizes = [2, 32], strides = [1, 1]} : vector<2x64xf32> to vector<2x32xf32>
    %76 = tpu.concatenate %8, %74, %71, %75 in 1 : vector<2x32xf32>, vector<2x32xf32>, vector<2x32xf32>, vector<2x32xf32> -> vector<2x128xf32>
    %c0_57 = arith.constant 0 : index
    %c0_58 = arith.constant 0 : index
    %77 = vector.load %arg2[%c0_57, %c0_58] : memref<128x256xf32, #tpu.memory_space<vmem>>, vector<128x256xf32>
    %cst_59 = arith.constant dense<0.000000e+00> : vector<2x256xf32>
    %78 = tpu.matmul %76, %77, %cst_59 {dimension_numbers = #tpu.dot_dimension_numbers<[1], [0], [0], [1], [0, 0, 1, 1], [], []>} : vector<2x128xf32>, vector<128x256xf32>, vector<2x256xf32> -> vector<2x256xf32>
    %c0_60 = arith.constant 0 : index
    %c0_61 = arith.constant 0 : index
    %79 = vector.load %arg3[%c0_60, %c0_61] : memref<1x256xf32, #tpu.memory_space<vmem>>, vector<1x256xf32>
    %80 = vector.broadcast %79 : vector<1x256xf32> to vector<2x256xf32>
    %81 = arith.addf %78, %80 : vector<2x256xf32>
    %82 = arith.negf %81 : vector<2x256xf32>
    %83 = math.exp %82 : vector<2x256xf32>
    %cst_62 = arith.constant 1.000000e+00 : f32
    %84 = vector.broadcast %cst_62 : f32 to vector<2x256xf32>
    %85 = arith.addf %84, %83 : vector<2x256xf32>
    %86 = arith.divf %84, %85 : vector<2x256xf32>
    %87 = math.tanh %81 : vector<2x256xf32>
    %88 = vector.extract_strided_slice %86 {offsets = [0, 0], sizes = [2, 64], strides = [1, 1]} : vector<2x256xf32> to vector<2x64xf32>
    %89 = vector.extract_strided_slice %86 {offsets = [0, 64], sizes = [2, 64], strides = [1, 1]} : vector<2x256xf32> to vector<2x64xf32>
    %90 = vector.extract_strided_slice %87 {offsets = [0, 128], sizes = [2, 64], strides = [1, 1]} : vector<2x256xf32> to vector<2x64xf32>
    %91 = vector.extract_strided_slice %86 {offsets = [0, 192], sizes = [2, 64], strides = [1, 1]} : vector<2x256xf32> to vector<2x64xf32>
    %92 = arith.mulf %89, %73 : vector<2x64xf32>
    %93 = arith.mulf %88, %90 : vector<2x64xf32>
    %94 = arith.addf %92, %93 : vector<2x64xf32>
    %95 = math.tanh %94 : vector<2x64xf32>
    %96 = arith.mulf %91, %95 : vector<2x64xf32>
    %97 = vector.extract_strided_slice %96 {offsets = [0, 0], sizes = [2, 32], strides = [1, 1]} : vector<2x64xf32> to vector<2x32xf32>
    %98 = vector.extract_strided_slice %96 {offsets = [0, 32], sizes = [2, 32], strides = [1, 1]} : vector<2x64xf32> to vector<2x32xf32>
    %99 = vector.extract_strided_slice %96 {offsets = [0, 0], sizes = [2, 32], strides = [1, 1]} : vector<2x64xf32> to vector<2x32xf32>
    %100 = vector.extract_strided_slice %96 {offsets = [0, 32], sizes = [2, 32], strides = [1, 1]} : vector<2x64xf32> to vector<2x32xf32>
    %101 = tpu.concatenate %17, %99, %62, %100 in 1 : vector<2x32xf32>, vector<2x32xf32>, vector<2x32xf32>, vector<2x32xf32> -> vector<2x128xf32>
    %c0_63 = arith.constant 0 : index
    %c0_64 = arith.constant 0 : index
    %102 = vector.load %arg2[%c0_63, %c0_64] : memref<128x256xf32, #tpu.memory_space<vmem>>, vector<128x256xf32>
    %cst_65 = arith.constant dense<0.000000e+00> : vector<2x256xf32>
    %103 = tpu.matmul %101, %102, %cst_65 {dimension_numbers = #tpu.dot_dimension_numbers<[1], [0], [0], [1], [0, 0, 1, 1], [], []>} : vector<2x128xf32>, vector<128x256xf32>, vector<2x256xf32> -> vector<2x256xf32>
    %c0_66 = arith.constant 0 : index
    %c0_67 = arith.constant 0 : index
    %104 = vector.load %arg3[%c0_66, %c0_67] : memref<1x256xf32, #tpu.memory_space<vmem>>, vector<1x256xf32>
    %105 = vector.broadcast %104 : vector<1x256xf32> to vector<2x256xf32>
    %106 = arith.addf %103, %105 : vector<2x256xf32>
    %107 = arith.negf %106 : vector<2x256xf32>
    %108 = math.exp %107 : vector<2x256xf32>
    %cst_68 = arith.constant 1.000000e+00 : f32
    %109 = vector.broadcast %cst_68 : f32 to vector<2x256xf32>
    %110 = arith.addf %109, %108 : vector<2x256xf32>
    %111 = arith.divf %109, %110 : vector<2x256xf32>
    %112 = math.tanh %106 : vector<2x256xf32>
    %113 = vector.extract_strided_slice %111 {offsets = [0, 0], sizes = [2, 64], strides = [1, 1]} : vector<2x256xf32> to vector<2x64xf32>
    %114 = vector.extract_strided_slice %111 {offsets = [0, 64], sizes = [2, 64], strides = [1, 1]} : vector<2x256xf32> to vector<2x64xf32>
    %115 = vector.extract_strided_slice %112 {offsets = [0, 128], sizes = [2, 64], strides = [1, 1]} : vector<2x256xf32> to vector<2x64xf32>
    %116 = vector.extract_strided_slice %111 {offsets = [0, 192], sizes = [2, 64], strides = [1, 1]} : vector<2x256xf32> to vector<2x64xf32>
    %117 = arith.mulf %114, %94 : vector<2x64xf32>
    %118 = arith.mulf %113, %115 : vector<2x64xf32>
    %119 = arith.addf %117, %118 : vector<2x64xf32>
    %120 = math.tanh %119 : vector<2x64xf32>
    %121 = arith.mulf %116, %120 : vector<2x64xf32>
    %122 = vector.extract_strided_slice %121 {offsets = [0, 0], sizes = [2, 32], strides = [1, 1]} : vector<2x64xf32> to vector<2x32xf32>
    %123 = vector.extract_strided_slice %121 {offsets = [0, 32], sizes = [2, 32], strides = [1, 1]} : vector<2x64xf32> to vector<2x32xf32>
    %124 = vector.extract_strided_slice %121 {offsets = [0, 0], sizes = [2, 32], strides = [1, 1]} : vector<2x64xf32> to vector<2x32xf32>
    %125 = vector.extract_strided_slice %121 {offsets = [0, 32], sizes = [2, 32], strides = [1, 1]} : vector<2x64xf32> to vector<2x32xf32>
    %126 = tpu.concatenate %26, %124, %53, %125 in 1 : vector<2x32xf32>, vector<2x32xf32>, vector<2x32xf32>, vector<2x32xf32> -> vector<2x128xf32>
    %c0_69 = arith.constant 0 : index
    %c0_70 = arith.constant 0 : index
    %127 = vector.load %arg2[%c0_69, %c0_70] : memref<128x256xf32, #tpu.memory_space<vmem>>, vector<128x256xf32>
    %cst_71 = arith.constant dense<0.000000e+00> : vector<2x256xf32>
    %128 = tpu.matmul %126, %127, %cst_71 {dimension_numbers = #tpu.dot_dimension_numbers<[1], [0], [0], [1], [0, 0, 1, 1], [], []>} : vector<2x128xf32>, vector<128x256xf32>, vector<2x256xf32> -> vector<2x256xf32>
    %c0_72 = arith.constant 0 : index
    %c0_73 = arith.constant 0 : index
    %129 = vector.load %arg3[%c0_72, %c0_73] : memref<1x256xf32, #tpu.memory_space<vmem>>, vector<1x256xf32>
    %130 = vector.broadcast %129 : vector<1x256xf32> to vector<2x256xf32>
    %131 = arith.addf %128, %130 : vector<2x256xf32>
    %132 = arith.negf %131 : vector<2x256xf32>
    %133 = math.exp %132 : vector<2x256xf32>
    %cst_74 = arith.constant 1.000000e+00 : f32
    %134 = vector.broadcast %cst_74 : f32 to vector<2x256xf32>
    %135 = arith.addf %134, %133 : vector<2x256xf32>
    %136 = arith.divf %134, %135 : vector<2x256xf32>
    %137 = math.tanh %131 : vector<2x256xf32>
    %138 = vector.extract_strided_slice %136 {offsets = [0, 0], sizes = [2, 64], strides = [1, 1]} : vector<2x256xf32> to vector<2x64xf32>
    %139 = vector.extract_strided_slice %136 {offsets = [0, 64], sizes = [2, 64], strides = [1, 1]} : vector<2x256xf32> to vector<2x64xf32>
    %140 = vector.extract_strided_slice %137 {offsets = [0, 128], sizes = [2, 64], strides = [1, 1]} : vector<2x256xf32> to vector<2x64xf32>
    %141 = vector.extract_strided_slice %136 {offsets = [0, 192], sizes = [2, 64], strides = [1, 1]} : vector<2x256xf32> to vector<2x64xf32>
    %142 = arith.mulf %139, %119 : vector<2x64xf32>
    %143 = arith.mulf %138, %140 : vector<2x64xf32>
    %144 = arith.addf %142, %143 : vector<2x64xf32>
    %145 = math.tanh %144 : vector<2x64xf32>
    %146 = arith.mulf %141, %145 : vector<2x64xf32>
    %147 = vector.extract_strided_slice %146 {offsets = [0, 0], sizes = [2, 32], strides = [1, 1]} : vector<2x64xf32> to vector<2x32xf32>
    %148 = vector.extract_strided_slice %146 {offsets = [0, 32], sizes = [2, 32], strides = [1, 1]} : vector<2x64xf32> to vector<2x32xf32>
    %149 = vector.extract_strided_slice %146 {offsets = [0, 0], sizes = [2, 32], strides = [1, 1]} : vector<2x64xf32> to vector<2x32xf32>
    %150 = vector.extract_strided_slice %146 {offsets = [0, 32], sizes = [2, 32], strides = [1, 1]} : vector<2x64xf32> to vector<2x32xf32>
    %151 = tpu.concatenate %35, %149, %44, %150 in 1 : vector<2x32xf32>, vector<2x32xf32>, vector<2x32xf32>, vector<2x32xf32> -> vector<2x128xf32>
    %c0_75 = arith.constant 0 : index
    %c0_76 = arith.constant 0 : index
    %152 = vector.load %arg2[%c0_75, %c0_76] : memref<128x256xf32, #tpu.memory_space<vmem>>, vector<128x256xf32>
    %cst_77 = arith.constant dense<0.000000e+00> : vector<2x256xf32>
    %153 = tpu.matmul %151, %152, %cst_77 {dimension_numbers = #tpu.dot_dimension_numbers<[1], [0], [0], [1], [0, 0, 1, 1], [], []>} : vector<2x128xf32>, vector<128x256xf32>, vector<2x256xf32> -> vector<2x256xf32>
    %c0_78 = arith.constant 0 : index
    %c0_79 = arith.constant 0 : index
    %154 = vector.load %arg3[%c0_78, %c0_79] : memref<1x256xf32, #tpu.memory_space<vmem>>, vector<1x256xf32>
    %155 = vector.broadcast %154 : vector<1x256xf32> to vector<2x256xf32>
    %156 = arith.addf %153, %155 : vector<2x256xf32>
    %157 = arith.negf %156 : vector<2x256xf32>
    %158 = math.exp %157 : vector<2x256xf32>
    %cst_80 = arith.constant 1.000000e+00 : f32
    %159 = vector.broadcast %cst_80 : f32 to vector<2x256xf32>
    %160 = arith.addf %159, %158 : vector<2x256xf32>
    %161 = arith.divf %159, %160 : vector<2x256xf32>
    %162 = math.tanh %156 : vector<2x256xf32>
    %163 = vector.extract_strided_slice %161 {offsets = [0, 0], sizes = [2, 64], strides = [1, 1]} : vector<2x256xf32> to vector<2x64xf32>
    %164 = vector.extract_strided_slice %161 {offsets = [0, 64], sizes = [2, 64], strides = [1, 1]} : vector<2x256xf32> to vector<2x64xf32>
    %165 = vector.extract_strided_slice %162 {offsets = [0, 128], sizes = [2, 64], strides = [1, 1]} : vector<2x256xf32> to vector<2x64xf32>
    %166 = vector.extract_strided_slice %161 {offsets = [0, 192], sizes = [2, 64], strides = [1, 1]} : vector<2x256xf32> to vector<2x64xf32>
    %167 = arith.mulf %164, %144 : vector<2x64xf32>
    %168 = arith.mulf %163, %165 : vector<2x64xf32>
    %169 = arith.addf %167, %168 : vector<2x64xf32>
    %170 = math.tanh %169 : vector<2x64xf32>
    %171 = arith.mulf %166, %170 : vector<2x64xf32>
    %172 = vector.extract_strided_slice %171 {offsets = [0, 0], sizes = [2, 32], strides = [1, 1]} : vector<2x64xf32> to vector<2x32xf32>
    %173 = vector.extract_strided_slice %171 {offsets = [0, 32], sizes = [2, 32], strides = [1, 1]} : vector<2x64xf32> to vector<2x32xf32>
    %174 = vector.extract_strided_slice %171 {offsets = [0, 0], sizes = [2, 32], strides = [1, 1]} : vector<2x64xf32> to vector<2x32xf32>
    %175 = vector.extract_strided_slice %171 {offsets = [0, 32], sizes = [2, 32], strides = [1, 1]} : vector<2x64xf32> to vector<2x32xf32>
    %176 = tpu.concatenate %44, %174, %35, %175 in 1 : vector<2x32xf32>, vector<2x32xf32>, vector<2x32xf32>, vector<2x32xf32> -> vector<2x128xf32>
    %c0_81 = arith.constant 0 : index
    %c0_82 = arith.constant 0 : index
    %177 = vector.load %arg2[%c0_81, %c0_82] : memref<128x256xf32, #tpu.memory_space<vmem>>, vector<128x256xf32>
    %cst_83 = arith.constant dense<0.000000e+00> : vector<2x256xf32>
    %178 = tpu.matmul %176, %177, %cst_83 {dimension_numbers = #tpu.dot_dimension_numbers<[1], [0], [0], [1], [0, 0, 1, 1], [], []>} : vector<2x128xf32>, vector<128x256xf32>, vector<2x256xf32> -> vector<2x256xf32>
    %c0_84 = arith.constant 0 : index
    %c0_85 = arith.constant 0 : index
    %179 = vector.load %arg3[%c0_84, %c0_85] : memref<1x256xf32, #tpu.memory_space<vmem>>, vector<1x256xf32>
    %180 = vector.broadcast %179 : vector<1x256xf32> to vector<2x256xf32>
    %181 = arith.addf %178, %180 : vector<2x256xf32>
    %182 = arith.negf %181 : vector<2x256xf32>
    %183 = math.exp %182 : vector<2x256xf32>
    %cst_86 = arith.constant 1.000000e+00 : f32
    %184 = vector.broadcast %cst_86 : f32 to vector<2x256xf32>
    %185 = arith.addf %184, %183 : vector<2x256xf32>
    %186 = arith.divf %184, %185 : vector<2x256xf32>
    %187 = math.tanh %181 : vector<2x256xf32>
    %188 = vector.extract_strided_slice %186 {offsets = [0, 0], sizes = [2, 64], strides = [1, 1]} : vector<2x256xf32> to vector<2x64xf32>
    %189 = vector.extract_strided_slice %186 {offsets = [0, 64], sizes = [2, 64], strides = [1, 1]} : vector<2x256xf32> to vector<2x64xf32>
    %190 = vector.extract_strided_slice %187 {offsets = [0, 128], sizes = [2, 64], strides = [1, 1]} : vector<2x256xf32> to vector<2x64xf32>
    %191 = vector.extract_strided_slice %186 {offsets = [0, 192], sizes = [2, 64], strides = [1, 1]} : vector<2x256xf32> to vector<2x64xf32>
    %192 = arith.mulf %189, %169 : vector<2x64xf32>
    %193 = arith.mulf %188, %190 : vector<2x64xf32>
    %194 = arith.addf %192, %193 : vector<2x64xf32>
    %195 = math.tanh %194 : vector<2x64xf32>
    %196 = arith.mulf %191, %195 : vector<2x64xf32>
    %197 = vector.extract_strided_slice %196 {offsets = [0, 0], sizes = [2, 32], strides = [1, 1]} : vector<2x64xf32> to vector<2x32xf32>
    %198 = vector.extract_strided_slice %196 {offsets = [0, 32], sizes = [2, 32], strides = [1, 1]} : vector<2x64xf32> to vector<2x32xf32>
    %199 = vector.extract_strided_slice %196 {offsets = [0, 0], sizes = [2, 32], strides = [1, 1]} : vector<2x64xf32> to vector<2x32xf32>
    %200 = vector.extract_strided_slice %196 {offsets = [0, 32], sizes = [2, 32], strides = [1, 1]} : vector<2x64xf32> to vector<2x32xf32>
    %201 = tpu.concatenate %53, %199, %26, %200 in 1 : vector<2x32xf32>, vector<2x32xf32>, vector<2x32xf32>, vector<2x32xf32> -> vector<2x128xf32>
    %c0_87 = arith.constant 0 : index
    %c0_88 = arith.constant 0 : index
    %202 = vector.load %arg2[%c0_87, %c0_88] : memref<128x256xf32, #tpu.memory_space<vmem>>, vector<128x256xf32>
    %cst_89 = arith.constant dense<0.000000e+00> : vector<2x256xf32>
    %203 = tpu.matmul %201, %202, %cst_89 {dimension_numbers = #tpu.dot_dimension_numbers<[1], [0], [0], [1], [0, 0, 1, 1], [], []>} : vector<2x128xf32>, vector<128x256xf32>, vector<2x256xf32> -> vector<2x256xf32>
    %c0_90 = arith.constant 0 : index
    %c0_91 = arith.constant 0 : index
    %204 = vector.load %arg3[%c0_90, %c0_91] : memref<1x256xf32, #tpu.memory_space<vmem>>, vector<1x256xf32>
    %205 = vector.broadcast %204 : vector<1x256xf32> to vector<2x256xf32>
    %206 = arith.addf %203, %205 : vector<2x256xf32>
    %207 = arith.negf %206 : vector<2x256xf32>
    %208 = math.exp %207 : vector<2x256xf32>
    %cst_92 = arith.constant 1.000000e+00 : f32
    %209 = vector.broadcast %cst_92 : f32 to vector<2x256xf32>
    %210 = arith.addf %209, %208 : vector<2x256xf32>
    %211 = arith.divf %209, %210 : vector<2x256xf32>
    %212 = math.tanh %206 : vector<2x256xf32>
    %213 = vector.extract_strided_slice %211 {offsets = [0, 0], sizes = [2, 64], strides = [1, 1]} : vector<2x256xf32> to vector<2x64xf32>
    %214 = vector.extract_strided_slice %211 {offsets = [0, 64], sizes = [2, 64], strides = [1, 1]} : vector<2x256xf32> to vector<2x64xf32>
    %215 = vector.extract_strided_slice %212 {offsets = [0, 128], sizes = [2, 64], strides = [1, 1]} : vector<2x256xf32> to vector<2x64xf32>
    %216 = vector.extract_strided_slice %211 {offsets = [0, 192], sizes = [2, 64], strides = [1, 1]} : vector<2x256xf32> to vector<2x64xf32>
    %217 = arith.mulf %214, %194 : vector<2x64xf32>
    %218 = arith.mulf %213, %215 : vector<2x64xf32>
    %219 = arith.addf %217, %218 : vector<2x64xf32>
    %220 = math.tanh %219 : vector<2x64xf32>
    %221 = arith.mulf %216, %220 : vector<2x64xf32>
    %222 = vector.extract_strided_slice %221 {offsets = [0, 0], sizes = [2, 32], strides = [1, 1]} : vector<2x64xf32> to vector<2x32xf32>
    %223 = vector.extract_strided_slice %221 {offsets = [0, 32], sizes = [2, 32], strides = [1, 1]} : vector<2x64xf32> to vector<2x32xf32>
    %224 = vector.extract_strided_slice %221 {offsets = [0, 0], sizes = [2, 32], strides = [1, 1]} : vector<2x64xf32> to vector<2x32xf32>
    %225 = vector.extract_strided_slice %221 {offsets = [0, 32], sizes = [2, 32], strides = [1, 1]} : vector<2x64xf32> to vector<2x32xf32>
    %226 = tpu.concatenate %62, %224, %17, %225 in 1 : vector<2x32xf32>, vector<2x32xf32>, vector<2x32xf32>, vector<2x32xf32> -> vector<2x128xf32>
    %c0_93 = arith.constant 0 : index
    %c0_94 = arith.constant 0 : index
    %227 = vector.load %arg2[%c0_93, %c0_94] : memref<128x256xf32, #tpu.memory_space<vmem>>, vector<128x256xf32>
    %cst_95 = arith.constant dense<0.000000e+00> : vector<2x256xf32>
    %228 = tpu.matmul %226, %227, %cst_95 {dimension_numbers = #tpu.dot_dimension_numbers<[1], [0], [0], [1], [0, 0, 1, 1], [], []>} : vector<2x128xf32>, vector<128x256xf32>, vector<2x256xf32> -> vector<2x256xf32>
    %c0_96 = arith.constant 0 : index
    %c0_97 = arith.constant 0 : index
    %229 = vector.load %arg3[%c0_96, %c0_97] : memref<1x256xf32, #tpu.memory_space<vmem>>, vector<1x256xf32>
    %230 = vector.broadcast %229 : vector<1x256xf32> to vector<2x256xf32>
    %231 = arith.addf %228, %230 : vector<2x256xf32>
    %232 = arith.negf %231 : vector<2x256xf32>
    %233 = math.exp %232 : vector<2x256xf32>
    %cst_98 = arith.constant 1.000000e+00 : f32
    %234 = vector.broadcast %cst_98 : f32 to vector<2x256xf32>
    %235 = arith.addf %234, %233 : vector<2x256xf32>
    %236 = arith.divf %234, %235 : vector<2x256xf32>
    %237 = math.tanh %231 : vector<2x256xf32>
    %238 = vector.extract_strided_slice %236 {offsets = [0, 0], sizes = [2, 64], strides = [1, 1]} : vector<2x256xf32> to vector<2x64xf32>
    %239 = vector.extract_strided_slice %236 {offsets = [0, 64], sizes = [2, 64], strides = [1, 1]} : vector<2x256xf32> to vector<2x64xf32>
    %240 = vector.extract_strided_slice %237 {offsets = [0, 128], sizes = [2, 64], strides = [1, 1]} : vector<2x256xf32> to vector<2x64xf32>
    %241 = vector.extract_strided_slice %236 {offsets = [0, 192], sizes = [2, 64], strides = [1, 1]} : vector<2x256xf32> to vector<2x64xf32>
    %242 = arith.mulf %239, %219 : vector<2x64xf32>
    %243 = arith.mulf %238, %240 : vector<2x64xf32>
    %244 = arith.addf %242, %243 : vector<2x64xf32>
    %245 = math.tanh %244 : vector<2x64xf32>
    %246 = arith.mulf %241, %245 : vector<2x64xf32>
    %247 = vector.extract_strided_slice %246 {offsets = [0, 0], sizes = [2, 32], strides = [1, 1]} : vector<2x64xf32> to vector<2x32xf32>
    %248 = vector.extract_strided_slice %246 {offsets = [0, 32], sizes = [2, 32], strides = [1, 1]} : vector<2x64xf32> to vector<2x32xf32>
    %249 = vector.extract_strided_slice %246 {offsets = [0, 0], sizes = [2, 32], strides = [1, 1]} : vector<2x64xf32> to vector<2x32xf32>
    %250 = vector.extract_strided_slice %246 {offsets = [0, 32], sizes = [2, 32], strides = [1, 1]} : vector<2x64xf32> to vector<2x32xf32>
    %251 = tpu.concatenate %71, %249, %8, %250 in 1 : vector<2x32xf32>, vector<2x32xf32>, vector<2x32xf32>, vector<2x32xf32> -> vector<2x128xf32>
    %c0_99 = arith.constant 0 : index
    %c0_100 = arith.constant 0 : index
    %252 = vector.load %arg2[%c0_99, %c0_100] : memref<128x256xf32, #tpu.memory_space<vmem>>, vector<128x256xf32>
    %cst_101 = arith.constant dense<0.000000e+00> : vector<2x256xf32>
    %253 = tpu.matmul %251, %252, %cst_101 {dimension_numbers = #tpu.dot_dimension_numbers<[1], [0], [0], [1], [0, 0, 1, 1], [], []>} : vector<2x128xf32>, vector<128x256xf32>, vector<2x256xf32> -> vector<2x256xf32>
    %c0_102 = arith.constant 0 : index
    %c0_103 = arith.constant 0 : index
    %254 = vector.load %arg3[%c0_102, %c0_103] : memref<1x256xf32, #tpu.memory_space<vmem>>, vector<1x256xf32>
    %255 = vector.broadcast %254 : vector<1x256xf32> to vector<2x256xf32>
    %256 = arith.addf %253, %255 : vector<2x256xf32>
    %257 = arith.negf %256 : vector<2x256xf32>
    %258 = math.exp %257 : vector<2x256xf32>
    %cst_104 = arith.constant 1.000000e+00 : f32
    %259 = vector.broadcast %cst_104 : f32 to vector<2x256xf32>
    %260 = arith.addf %259, %258 : vector<2x256xf32>
    %261 = arith.divf %259, %260 : vector<2x256xf32>
    %262 = math.tanh %256 : vector<2x256xf32>
    %263 = vector.extract_strided_slice %261 {offsets = [0, 0], sizes = [2, 64], strides = [1, 1]} : vector<2x256xf32> to vector<2x64xf32>
    %264 = vector.extract_strided_slice %261 {offsets = [0, 64], sizes = [2, 64], strides = [1, 1]} : vector<2x256xf32> to vector<2x64xf32>
    %265 = vector.extract_strided_slice %262 {offsets = [0, 128], sizes = [2, 64], strides = [1, 1]} : vector<2x256xf32> to vector<2x64xf32>
    %266 = vector.extract_strided_slice %261 {offsets = [0, 192], sizes = [2, 64], strides = [1, 1]} : vector<2x256xf32> to vector<2x64xf32>
    %267 = arith.mulf %264, %244 : vector<2x64xf32>
    %268 = arith.mulf %263, %265 : vector<2x64xf32>
    %269 = arith.addf %267, %268 : vector<2x64xf32>
    %270 = math.tanh %269 : vector<2x64xf32>
    %271 = arith.mulf %266, %270 : vector<2x64xf32>
    %272 = vector.extract_strided_slice %271 {offsets = [0, 0], sizes = [2, 32], strides = [1, 1]} : vector<2x64xf32> to vector<2x32xf32>
    %273 = vector.extract_strided_slice %271 {offsets = [0, 32], sizes = [2, 32], strides = [1, 1]} : vector<2x64xf32> to vector<2x32xf32>
    %274 = tpu.concatenate %97, %273 in 1 : vector<2x32xf32>, vector<2x32xf32> -> vector<2x64xf32>
    %275 = tpu.concatenate %122, %248 in 1 : vector<2x32xf32>, vector<2x32xf32> -> vector<2x64xf32>
    %276 = tpu.concatenate %147, %223 in 1 : vector<2x32xf32>, vector<2x32xf32> -> vector<2x64xf32>
    %277 = tpu.concatenate %172, %198 in 1 : vector<2x32xf32>, vector<2x32xf32> -> vector<2x64xf32>
    %278 = tpu.concatenate %197, %173 in 1 : vector<2x32xf32>, vector<2x32xf32> -> vector<2x64xf32>
    %279 = tpu.concatenate %222, %148 in 1 : vector<2x32xf32>, vector<2x32xf32> -> vector<2x64xf32>
    %280 = tpu.concatenate %247, %123 in 1 : vector<2x32xf32>, vector<2x32xf32> -> vector<2x64xf32>
    %281 = tpu.concatenate %272, %98 in 1 : vector<2x32xf32>, vector<2x32xf32> -> vector<2x64xf32>
    %cst_105 = arith.constant 0.000000e+00 : f32
    %282 = vector.broadcast %cst_105 : f32 to vector<2x64xf32>
    %cst_106 = arith.constant 0.000000e+00 : f32
    %283 = vector.broadcast %cst_106 : f32 to vector<2x64xf32>
    %284 = vector.extract_strided_slice %282 {offsets = [0, 0], sizes = [2, 32], strides = [1, 1]} : vector<2x64xf32> to vector<2x32xf32>
    %285 = vector.extract_strided_slice %282 {offsets = [0, 32], sizes = [2, 32], strides = [1, 1]} : vector<2x64xf32> to vector<2x32xf32>
    %286 = tpu.concatenate %274, %284, %281, %285 in 1 : vector<2x64xf32>, vector<2x32xf32>, vector<2x64xf32>, vector<2x32xf32> -> vector<2x192xf32>
    %c0_107 = arith.constant 0 : index
    %c0_108 = arith.constant 0 : index
    %287 = vector.load %arg4[%c0_107, %c0_108] : memref<192x256xf32, #tpu.memory_space<vmem>>, vector<192x256xf32>
    %cst_109 = arith.constant dense<0.000000e+00> : vector<2x256xf32>
    %288 = tpu.matmul %286, %287, %cst_109 {dimension_numbers = #tpu.dot_dimension_numbers<[1], [0], [0], [1], [0, 0, 1, 1], [], []>} : vector<2x192xf32>, vector<192x256xf32>, vector<2x256xf32> -> vector<2x256xf32>
    %c0_110 = arith.constant 0 : index
    %c0_111 = arith.constant 0 : index
    %289 = vector.load %arg5[%c0_110, %c0_111] : memref<1x256xf32, #tpu.memory_space<vmem>>, vector<1x256xf32>
    %290 = vector.broadcast %289 : vector<1x256xf32> to vector<2x256xf32>
    %291 = arith.addf %288, %290 : vector<2x256xf32>
    %292 = arith.negf %291 : vector<2x256xf32>
    %293 = math.exp %292 : vector<2x256xf32>
    %cst_112 = arith.constant 1.000000e+00 : f32
    %294 = vector.broadcast %cst_112 : f32 to vector<2x256xf32>
    %295 = arith.addf %294, %293 : vector<2x256xf32>
    %296 = arith.divf %294, %295 : vector<2x256xf32>
    %297 = math.tanh %291 : vector<2x256xf32>
    %298 = vector.extract_strided_slice %296 {offsets = [0, 0], sizes = [2, 64], strides = [1, 1]} : vector<2x256xf32> to vector<2x64xf32>
    %299 = vector.extract_strided_slice %296 {offsets = [0, 64], sizes = [2, 64], strides = [1, 1]} : vector<2x256xf32> to vector<2x64xf32>
    %300 = vector.extract_strided_slice %297 {offsets = [0, 128], sizes = [2, 64], strides = [1, 1]} : vector<2x256xf32> to vector<2x64xf32>
    %301 = vector.extract_strided_slice %296 {offsets = [0, 192], sizes = [2, 64], strides = [1, 1]} : vector<2x256xf32> to vector<2x64xf32>
    %302 = arith.mulf %299, %283 : vector<2x64xf32>
    %303 = arith.mulf %298, %300 : vector<2x64xf32>
    %304 = arith.addf %302, %303 : vector<2x64xf32>
    %305 = math.tanh %304 : vector<2x64xf32>
    %306 = arith.mulf %301, %305 : vector<2x64xf32>
    %307 = vector.extract_strided_slice %306 {offsets = [0, 0], sizes = [2, 32], strides = [1, 1]} : vector<2x64xf32> to vector<2x32xf32>
    %308 = vector.extract_strided_slice %306 {offsets = [0, 32], sizes = [2, 32], strides = [1, 1]} : vector<2x64xf32> to vector<2x32xf32>
    %309 = tpu.concatenate %275, %307, %280, %308 in 1 : vector<2x64xf32>, vector<2x32xf32>, vector<2x64xf32>, vector<2x32xf32> -> vector<2x192xf32>
    %c0_113 = arith.constant 0 : index
    %c0_114 = arith.constant 0 : index
    %310 = vector.load %arg4[%c0_113, %c0_114] : memref<192x256xf32, #tpu.memory_space<vmem>>, vector<192x256xf32>
    %cst_115 = arith.constant dense<0.000000e+00> : vector<2x256xf32>
    %311 = tpu.matmul %309, %310, %cst_115 {dimension_numbers = #tpu.dot_dimension_numbers<[1], [0], [0], [1], [0, 0, 1, 1], [], []>} : vector<2x192xf32>, vector<192x256xf32>, vector<2x256xf32> -> vector<2x256xf32>
    %c0_116 = arith.constant 0 : index
    %c0_117 = arith.constant 0 : index
    %312 = vector.load %arg5[%c0_116, %c0_117] : memref<1x256xf32, #tpu.memory_space<vmem>>, vector<1x256xf32>
    %313 = vector.broadcast %312 : vector<1x256xf32> to vector<2x256xf32>
    %314 = arith.addf %311, %313 : vector<2x256xf32>
    %315 = arith.negf %314 : vector<2x256xf32>
    %316 = math.exp %315 : vector<2x256xf32>
    %cst_118 = arith.constant 1.000000e+00 : f32
    %317 = vector.broadcast %cst_118 : f32 to vector<2x256xf32>
    %318 = arith.addf %317, %316 : vector<2x256xf32>
    %319 = arith.divf %317, %318 : vector<2x256xf32>
    %320 = math.tanh %314 : vector<2x256xf32>
    %321 = vector.extract_strided_slice %319 {offsets = [0, 0], sizes = [2, 64], strides = [1, 1]} : vector<2x256xf32> to vector<2x64xf32>
    %322 = vector.extract_strided_slice %319 {offsets = [0, 64], sizes = [2, 64], strides = [1, 1]} : vector<2x256xf32> to vector<2x64xf32>
    %323 = vector.extract_strided_slice %320 {offsets = [0, 128], sizes = [2, 64], strides = [1, 1]} : vector<2x256xf32> to vector<2x64xf32>
    %324 = vector.extract_strided_slice %319 {offsets = [0, 192], sizes = [2, 64], strides = [1, 1]} : vector<2x256xf32> to vector<2x64xf32>
    %325 = arith.mulf %322, %304 : vector<2x64xf32>
    %326 = arith.mulf %321, %323 : vector<2x64xf32>
    %327 = arith.addf %325, %326 : vector<2x64xf32>
    %328 = math.tanh %327 : vector<2x64xf32>
    %329 = arith.mulf %324, %328 : vector<2x64xf32>
    %330 = vector.extract_strided_slice %329 {offsets = [0, 0], sizes = [2, 32], strides = [1, 1]} : vector<2x64xf32> to vector<2x32xf32>
    %331 = vector.extract_strided_slice %329 {offsets = [0, 32], sizes = [2, 32], strides = [1, 1]} : vector<2x64xf32> to vector<2x32xf32>
    %332 = tpu.concatenate %276, %330, %279, %331 in 1 : vector<2x64xf32>, vector<2x32xf32>, vector<2x64xf32>, vector<2x32xf32> -> vector<2x192xf32>
    %c0_119 = arith.constant 0 : index
    %c0_120 = arith.constant 0 : index
    %333 = vector.load %arg4[%c0_119, %c0_120] : memref<192x256xf32, #tpu.memory_space<vmem>>, vector<192x256xf32>
    %cst_121 = arith.constant dense<0.000000e+00> : vector<2x256xf32>
    %334 = tpu.matmul %332, %333, %cst_121 {dimension_numbers = #tpu.dot_dimension_numbers<[1], [0], [0], [1], [0, 0, 1, 1], [], []>} : vector<2x192xf32>, vector<192x256xf32>, vector<2x256xf32> -> vector<2x256xf32>
    %c0_122 = arith.constant 0 : index
    %c0_123 = arith.constant 0 : index
    %335 = vector.load %arg5[%c0_122, %c0_123] : memref<1x256xf32, #tpu.memory_space<vmem>>, vector<1x256xf32>
    %336 = vector.broadcast %335 : vector<1x256xf32> to vector<2x256xf32>
    %337 = arith.addf %334, %336 : vector<2x256xf32>
    %338 = arith.negf %337 : vector<2x256xf32>
    %339 = math.exp %338 : vector<2x256xf32>
    %cst_124 = arith.constant 1.000000e+00 : f32
    %340 = vector.broadcast %cst_124 : f32 to vector<2x256xf32>
    %341 = arith.addf %340, %339 : vector<2x256xf32>
    %342 = arith.divf %340, %341 : vector<2x256xf32>
    %343 = math.tanh %337 : vector<2x256xf32>
    %344 = vector.extract_strided_slice %342 {offsets = [0, 0], sizes = [2, 64], strides = [1, 1]} : vector<2x256xf32> to vector<2x64xf32>
    %345 = vector.extract_strided_slice %342 {offsets = [0, 64], sizes = [2, 64], strides = [1, 1]} : vector<2x256xf32> to vector<2x64xf32>
    %346 = vector.extract_strided_slice %343 {offsets = [0, 128], sizes = [2, 64], strides = [1, 1]} : vector<2x256xf32> to vector<2x64xf32>
    %347 = vector.extract_strided_slice %342 {offsets = [0, 192], sizes = [2, 64], strides = [1, 1]} : vector<2x256xf32> to vector<2x64xf32>
    %348 = arith.mulf %345, %327 : vector<2x64xf32>
    %349 = arith.mulf %344, %346 : vector<2x64xf32>
    %350 = arith.addf %348, %349 : vector<2x64xf32>
    %351 = math.tanh %350 : vector<2x64xf32>
    %352 = arith.mulf %347, %351 : vector<2x64xf32>
    %353 = vector.extract_strided_slice %352 {offsets = [0, 0], sizes = [2, 32], strides = [1, 1]} : vector<2x64xf32> to vector<2x32xf32>
    %354 = vector.extract_strided_slice %352 {offsets = [0, 32], sizes = [2, 32], strides = [1, 1]} : vector<2x64xf32> to vector<2x32xf32>
    %355 = tpu.concatenate %277, %353, %278, %354 in 1 : vector<2x64xf32>, vector<2x32xf32>, vector<2x64xf32>, vector<2x32xf32> -> vector<2x192xf32>
    %c0_125 = arith.constant 0 : index
    %c0_126 = arith.constant 0 : index
    %356 = vector.load %arg4[%c0_125, %c0_126] : memref<192x256xf32, #tpu.memory_space<vmem>>, vector<192x256xf32>
    %cst_127 = arith.constant dense<0.000000e+00> : vector<2x256xf32>
    %357 = tpu.matmul %355, %356, %cst_127 {dimension_numbers = #tpu.dot_dimension_numbers<[1], [0], [0], [1], [0, 0, 1, 1], [], []>} : vector<2x192xf32>, vector<192x256xf32>, vector<2x256xf32> -> vector<2x256xf32>
    %c0_128 = arith.constant 0 : index
    %c0_129 = arith.constant 0 : index
    %358 = vector.load %arg5[%c0_128, %c0_129] : memref<1x256xf32, #tpu.memory_space<vmem>>, vector<1x256xf32>
    %359 = vector.broadcast %358 : vector<1x256xf32> to vector<2x256xf32>
    %360 = arith.addf %357, %359 : vector<2x256xf32>
    %361 = arith.negf %360 : vector<2x256xf32>
    %362 = math.exp %361 : vector<2x256xf32>
    %cst_130 = arith.constant 1.000000e+00 : f32
    %363 = vector.broadcast %cst_130 : f32 to vector<2x256xf32>
    %364 = arith.addf %363, %362 : vector<2x256xf32>
    %365 = arith.divf %363, %364 : vector<2x256xf32>
    %366 = math.tanh %360 : vector<2x256xf32>
    %367 = vector.extract_strided_slice %365 {offsets = [0, 0], sizes = [2, 64], strides = [1, 1]} : vector<2x256xf32> to vector<2x64xf32>
    %368 = vector.extract_strided_slice %365 {offsets = [0, 64], sizes = [2, 64], strides = [1, 1]} : vector<2x256xf32> to vector<2x64xf32>
    %369 = vector.extract_strided_slice %366 {offsets = [0, 128], sizes = [2, 64], strides = [1, 1]} : vector<2x256xf32> to vector<2x64xf32>
    %370 = vector.extract_strided_slice %365 {offsets = [0, 192], sizes = [2, 64], strides = [1, 1]} : vector<2x256xf32> to vector<2x64xf32>
    %371 = arith.mulf %368, %350 : vector<2x64xf32>
    %372 = arith.mulf %367, %369 : vector<2x64xf32>
    %373 = arith.addf %371, %372 : vector<2x64xf32>
    %374 = math.tanh %373 : vector<2x64xf32>
    %375 = arith.mulf %370, %374 : vector<2x64xf32>
    %376 = vector.extract_strided_slice %375 {offsets = [0, 0], sizes = [2, 32], strides = [1, 1]} : vector<2x64xf32> to vector<2x32xf32>
    %377 = vector.extract_strided_slice %375 {offsets = [0, 32], sizes = [2, 32], strides = [1, 1]} : vector<2x64xf32> to vector<2x32xf32>
    %378 = tpu.concatenate %278, %376, %277, %377 in 1 : vector<2x64xf32>, vector<2x32xf32>, vector<2x64xf32>, vector<2x32xf32> -> vector<2x192xf32>
    %c0_131 = arith.constant 0 : index
    %c0_132 = arith.constant 0 : index
    %379 = vector.load %arg4[%c0_131, %c0_132] : memref<192x256xf32, #tpu.memory_space<vmem>>, vector<192x256xf32>
    %cst_133 = arith.constant dense<0.000000e+00> : vector<2x256xf32>
    %380 = tpu.matmul %378, %379, %cst_133 {dimension_numbers = #tpu.dot_dimension_numbers<[1], [0], [0], [1], [0, 0, 1, 1], [], []>} : vector<2x192xf32>, vector<192x256xf32>, vector<2x256xf32> -> vector<2x256xf32>
    %c0_134 = arith.constant 0 : index
    %c0_135 = arith.constant 0 : index
    %381 = vector.load %arg5[%c0_134, %c0_135] : memref<1x256xf32, #tpu.memory_space<vmem>>, vector<1x256xf32>
    %382 = vector.broadcast %381 : vector<1x256xf32> to vector<2x256xf32>
    %383 = arith.addf %380, %382 : vector<2x256xf32>
    %384 = arith.negf %383 : vector<2x256xf32>
    %385 = math.exp %384 : vector<2x256xf32>
    %cst_136 = arith.constant 1.000000e+00 : f32
    %386 = vector.broadcast %cst_136 : f32 to vector<2x256xf32>
    %387 = arith.addf %386, %385 : vector<2x256xf32>
    %388 = arith.divf %386, %387 : vector<2x256xf32>
    %389 = math.tanh %383 : vector<2x256xf32>
    %390 = vector.extract_strided_slice %388 {offsets = [0, 0], sizes = [2, 64], strides = [1, 1]} : vector<2x256xf32> to vector<2x64xf32>
    %391 = vector.extract_strided_slice %388 {offsets = [0, 64], sizes = [2, 64], strides = [1, 1]} : vector<2x256xf32> to vector<2x64xf32>
    %392 = vector.extract_strided_slice %389 {offsets = [0, 128], sizes = [2, 64], strides = [1, 1]} : vector<2x256xf32> to vector<2x64xf32>
    %393 = vector.extract_strided_slice %388 {offsets = [0, 192], sizes = [2, 64], strides = [1, 1]} : vector<2x256xf32> to vector<2x64xf32>
    %394 = arith.mulf %391, %373 : vector<2x64xf32>
    %395 = arith.mulf %390, %392 : vector<2x64xf32>
    %396 = arith.addf %394, %395 : vector<2x64xf32>
    %397 = math.tanh %396 : vector<2x64xf32>
    %398 = arith.mulf %393, %397 : vector<2x64xf32>
    %399 = vector.extract_strided_slice %398 {offsets = [0, 0], sizes = [2, 32], strides = [1, 1]} : vector<2x64xf32> to vector<2x32xf32>
    %400 = vector.extract_strided_slice %398 {offsets = [0, 32], sizes = [2, 32], strides = [1, 1]} : vector<2x64xf32> to vector<2x32xf32>
    %401 = tpu.concatenate %279, %399, %276, %400 in 1 : vector<2x64xf32>, vector<2x32xf32>, vector<2x64xf32>, vector<2x32xf32> -> vector<2x192xf32>
    %c0_137 = arith.constant 0 : index
    %c0_138 = arith.constant 0 : index
    %402 = vector.load %arg4[%c0_137, %c0_138] : memref<192x256xf32, #tpu.memory_space<vmem>>, vector<192x256xf32>
    %cst_139 = arith.constant dense<0.000000e+00> : vector<2x256xf32>
    %403 = tpu.matmul %401, %402, %cst_139 {dimension_numbers = #tpu.dot_dimension_numbers<[1], [0], [0], [1], [0, 0, 1, 1], [], []>} : vector<2x192xf32>, vector<192x256xf32>, vector<2x256xf32> -> vector<2x256xf32>
    %c0_140 = arith.constant 0 : index
    %c0_141 = arith.constant 0 : index
    %404 = vector.load %arg5[%c0_140, %c0_141] : memref<1x256xf32, #tpu.memory_space<vmem>>, vector<1x256xf32>
    %405 = vector.broadcast %404 : vector<1x256xf32> to vector<2x256xf32>
    %406 = arith.addf %403, %405 : vector<2x256xf32>
    %407 = arith.negf %406 : vector<2x256xf32>
    %408 = math.exp %407 : vector<2x256xf32>
    %cst_142 = arith.constant 1.000000e+00 : f32
    %409 = vector.broadcast %cst_142 : f32 to vector<2x256xf32>
    %410 = arith.addf %409, %408 : vector<2x256xf32>
    %411 = arith.divf %409, %410 : vector<2x256xf32>
    %412 = math.tanh %406 : vector<2x256xf32>
    %413 = vector.extract_strided_slice %411 {offsets = [0, 0], sizes = [2, 64], strides = [1, 1]} : vector<2x256xf32> to vector<2x64xf32>
    %414 = vector.extract_strided_slice %411 {offsets = [0, 64], sizes = [2, 64], strides = [1, 1]} : vector<2x256xf32> to vector<2x64xf32>
    %415 = vector.extract_strided_slice %412 {offsets = [0, 128], sizes = [2, 64], strides = [1, 1]} : vector<2x256xf32> to vector<2x64xf32>
    %416 = vector.extract_strided_slice %411 {offsets = [0, 192], sizes = [2, 64], strides = [1, 1]} : vector<2x256xf32> to vector<2x64xf32>
    %417 = arith.mulf %414, %396 : vector<2x64xf32>
    %418 = arith.mulf %413, %415 : vector<2x64xf32>
    %419 = arith.addf %417, %418 : vector<2x64xf32>
    %420 = math.tanh %419 : vector<2x64xf32>
    %421 = arith.mulf %416, %420 : vector<2x64xf32>
    %422 = vector.extract_strided_slice %421 {offsets = [0, 0], sizes = [2, 32], strides = [1, 1]} : vector<2x64xf32> to vector<2x32xf32>
    %423 = vector.extract_strided_slice %421 {offsets = [0, 32], sizes = [2, 32], strides = [1, 1]} : vector<2x64xf32> to vector<2x32xf32>
    %424 = tpu.concatenate %280, %422, %275, %423 in 1 : vector<2x64xf32>, vector<2x32xf32>, vector<2x64xf32>, vector<2x32xf32> -> vector<2x192xf32>
    %c0_143 = arith.constant 0 : index
    %c0_144 = arith.constant 0 : index
    %425 = vector.load %arg4[%c0_143, %c0_144] : memref<192x256xf32, #tpu.memory_space<vmem>>, vector<192x256xf32>
    %cst_145 = arith.constant dense<0.000000e+00> : vector<2x256xf32>
    %426 = tpu.matmul %424, %425, %cst_145 {dimension_numbers = #tpu.dot_dimension_numbers<[1], [0], [0], [1], [0, 0, 1, 1], [], []>} : vector<2x192xf32>, vector<192x256xf32>, vector<2x256xf32> -> vector<2x256xf32>
    %c0_146 = arith.constant 0 : index
    %c0_147 = arith.constant 0 : index
    %427 = vector.load %arg5[%c0_146, %c0_147] : memref<1x256xf32, #tpu.memory_space<vmem>>, vector<1x256xf32>
    %428 = vector.broadcast %427 : vector<1x256xf32> to vector<2x256xf32>
    %429 = arith.addf %426, %428 : vector<2x256xf32>
    %430 = arith.negf %429 : vector<2x256xf32>
    %431 = math.exp %430 : vector<2x256xf32>
    %cst_148 = arith.constant 1.000000e+00 : f32
    %432 = vector.broadcast %cst_148 : f32 to vector<2x256xf32>
    %433 = arith.addf %432, %431 : vector<2x256xf32>
    %434 = arith.divf %432, %433 : vector<2x256xf32>
    %435 = math.tanh %429 : vector<2x256xf32>
    %436 = vector.extract_strided_slice %434 {offsets = [0, 0], sizes = [2, 64], strides = [1, 1]} : vector<2x256xf32> to vector<2x64xf32>
    %437 = vector.extract_strided_slice %434 {offsets = [0, 64], sizes = [2, 64], strides = [1, 1]} : vector<2x256xf32> to vector<2x64xf32>
    %438 = vector.extract_strided_slice %435 {offsets = [0, 128], sizes = [2, 64], strides = [1, 1]} : vector<2x256xf32> to vector<2x64xf32>
    %439 = vector.extract_strided_slice %434 {offsets = [0, 192], sizes = [2, 64], strides = [1, 1]} : vector<2x256xf32> to vector<2x64xf32>
    %440 = arith.mulf %437, %419 : vector<2x64xf32>
    %441 = arith.mulf %436, %438 : vector<2x64xf32>
    %442 = arith.addf %440, %441 : vector<2x64xf32>
    %443 = math.tanh %442 : vector<2x64xf32>
    %444 = arith.mulf %439, %443 : vector<2x64xf32>
    %445 = vector.extract_strided_slice %444 {offsets = [0, 0], sizes = [2, 32], strides = [1, 1]} : vector<2x64xf32> to vector<2x32xf32>
    %446 = vector.extract_strided_slice %444 {offsets = [0, 32], sizes = [2, 32], strides = [1, 1]} : vector<2x64xf32> to vector<2x32xf32>
    %447 = tpu.concatenate %281, %445, %274, %446 in 1 : vector<2x64xf32>, vector<2x32xf32>, vector<2x64xf32>, vector<2x32xf32> -> vector<2x192xf32>
    %c0_149 = arith.constant 0 : index
    %c0_150 = arith.constant 0 : index
    %448 = vector.load %arg4[%c0_149, %c0_150] : memref<192x256xf32, #tpu.memory_space<vmem>>, vector<192x256xf32>
    %cst_151 = arith.constant dense<0.000000e+00> : vector<2x256xf32>
    %449 = tpu.matmul %447, %448, %cst_151 {dimension_numbers = #tpu.dot_dimension_numbers<[1], [0], [0], [1], [0, 0, 1, 1], [], []>} : vector<2x192xf32>, vector<192x256xf32>, vector<2x256xf32> -> vector<2x256xf32>
    %c0_152 = arith.constant 0 : index
    %c0_153 = arith.constant 0 : index
    %450 = vector.load %arg5[%c0_152, %c0_153] : memref<1x256xf32, #tpu.memory_space<vmem>>, vector<1x256xf32>
    %451 = vector.broadcast %450 : vector<1x256xf32> to vector<2x256xf32>
    %452 = arith.addf %449, %451 : vector<2x256xf32>
    %453 = arith.negf %452 : vector<2x256xf32>
    %454 = math.exp %453 : vector<2x256xf32>
    %cst_154 = arith.constant 1.000000e+00 : f32
    %455 = vector.broadcast %cst_154 : f32 to vector<2x256xf32>
    %456 = arith.addf %455, %454 : vector<2x256xf32>
    %457 = arith.divf %455, %456 : vector<2x256xf32>
    %458 = math.tanh %452 : vector<2x256xf32>
    %459 = vector.extract_strided_slice %457 {offsets = [0, 0], sizes = [2, 64], strides = [1, 1]} : vector<2x256xf32> to vector<2x64xf32>
    %460 = vector.extract_strided_slice %457 {offsets = [0, 64], sizes = [2, 64], strides = [1, 1]} : vector<2x256xf32> to vector<2x64xf32>
    %461 = vector.extract_strided_slice %458 {offsets = [0, 128], sizes = [2, 64], strides = [1, 1]} : vector<2x256xf32> to vector<2x64xf32>
    %462 = vector.extract_strided_slice %457 {offsets = [0, 192], sizes = [2, 64], strides = [1, 1]} : vector<2x256xf32> to vector<2x64xf32>
    %463 = arith.mulf %460, %442 : vector<2x64xf32>
    %464 = arith.mulf %459, %461 : vector<2x64xf32>
    %465 = arith.addf %463, %464 : vector<2x64xf32>
    %466 = math.tanh %465 : vector<2x64xf32>
    %467 = arith.mulf %462, %466 : vector<2x64xf32>
    %c0_155 = arith.constant 0 : index
    %c0_156 = arith.constant 0 : index
    %468 = vector.load %arg6[%c0_155, %c0_156] : memref<64x32xf32, #tpu.memory_space<vmem>>, vector<64x32xf32>
    %cst_157 = arith.constant dense<0.000000e+00> : vector<2x32xf32>
    %469 = tpu.matmul %467, %468, %cst_157 {dimension_numbers = #tpu.dot_dimension_numbers<[1], [0], [0], [1], [0, 0, 1, 1], [], []>} : vector<2x64xf32>, vector<64x32xf32>, vector<2x32xf32> -> vector<2x32xf32>
    %c0_158 = arith.constant 0 : index
    %c0_159 = arith.constant 0 : index
    %470 = vector.load %arg7[%c0_158, %c0_159] : memref<1x32xf32, #tpu.memory_space<vmem>>, vector<1x32xf32>
    %471 = vector.broadcast %470 : vector<1x32xf32> to vector<2x32xf32>
    %472 = arith.addf %469, %471 : vector<2x32xf32>
    %cst_160 = arith.constant 0.000000e+00 : f32
    %473 = vector.broadcast %cst_160 : f32 to vector<2x32xf32>
    %474 = arith.maximumf %472, %473 : vector<2x32xf32>
    %c0_161 = arith.constant 0 : index
    %c0_162 = arith.constant 0 : index
    %475 = vector.load %arg8[%c0_161, %c0_162] : memref<32x1xf32, #tpu.memory_space<vmem>>, vector<32x1xf32>
    %cst_163 = arith.constant dense<0.000000e+00> : vector<2x1xf32>
    %476 = tpu.matmul %474, %475, %cst_163 {dimension_numbers = #tpu.dot_dimension_numbers<[1], [0], [0], [1], [0, 0, 1, 1], [], []>} : vector<2x32xf32>, vector<32x1xf32>, vector<2x1xf32> -> vector<2x1xf32>
    %c0_164 = arith.constant 0 : index
    %c0_165 = arith.constant 0 : index
    %477 = vector.load %arg9[%c0_164, %c0_165] : memref<1x1xf32, #tpu.memory_space<vmem>>, vector<1x1xf32>
    %478 = vector.broadcast %477 : vector<1x1xf32> to vector<2x1xf32>
    %479 = arith.addf %476, %478 : vector<2x1xf32>
    %c0_166 = arith.constant 0 : index
    %c0_167 = arith.constant 0 : index
    %480 = vector.load %arg10[%c0_166, %c0_167] : memref<2x1xf32, #tpu.memory_space<vmem>>, vector<2x1xf32>
    tpu.vector_store %arg10[%c0_166, %c0_167], %479 {strides = array<i32>} : memref<2x1xf32, #tpu.memory_space<vmem>>, vector<2x1xf32>,
    return
  }
}

</mosaic_0001>

<llo_original>
// kernel: modified_rnn_forward.1
$region0: #{modified_rnn_forward.1}
  #allocation0 [shape = 'u32[]', space=smem, size = 0x4, offset = 0x4, fixed_abs, tag = 'smem constant byte address 0x4 - core index']
  #allocation1 [shape = 'u32[144,128]{1,0:T(1,128)}', space=vmem, size = 0x12000, scoped, tag = 'internal scratch']
  #allocation2 [shape = 'f32[1,1]{1,0:T(1,128)S(1)}', space=vmem, size = 0x200, scoped, tag = 'scoped memory for modified_rnn_forward.1']
  %s0 = inlined_call_operand.vmem [shape: s32[8,2], index: 0, kind: input, shape index: {}]
  %s1 = inlined_call_operand.vmem [shape: f32[50,1,32], index: 1, kind: input, shape index: {}]
  %s2 = inlined_call_operand.hbm [shape: f32[128,256], index: 2, kind: input, shape index: {}]
  %s3 = inlined_call_operand.vmem [shape: f32[1,256], index: 3, kind: input, shape index: {}]
  %s4 = inlined_call_operand.hbm [shape: f32[192,256], index: 4, kind: input, shape index: {}]
  %s5 = inlined_call_operand.vmem [shape: f32[1,256], index: 5, kind: input, shape index: {}]
  %s6 = inlined_call_operand.vmem [shape: f32[64,32], index: 6, kind: input, shape index: {}]
  %s7 = inlined_call_operand.vmem [shape: f32[1,32], index: 7, kind: input, shape index: {}]
  %s8 = inlined_call_operand.vmem [shape: f32[32,1], index: 8, kind: input, shape index: {}]
  %s9 = inlined_call_operand.<no memory space> [shape: f32[1,1], index: 9, kind: input, shape index: {}]
  %s10 = inlined_call_operand.vmem [shape: f32[2,1], index: 10, kind: output, shape index: {}]
  %s11 = sld [smem:[#allocation0]]
  $region62: #{modified_rnn_forward.1} parent=0
    _
  %s13 = ssub.s32 1, %s11
  %s14 = scalar_select 0, %s13, %s11
  %v15 = vstv %s9
  %16 = vst [vmem:[#allocation2] sm:$0x1] %v15
  $region1: #{modified_rnn_forward.1} parent=0
    #allocation3 [shape = 'u8[4096]{0}', space=smem, size = 0x1000, scoped, tag = 'input window, operand 0, single buffered']
    #allocation4 [shape = 's32[1]{0}', space=sflag, size = 0x4, scoped, tag = 'scoped memory for modified_rnn_forward.1']
    #allocation5 [shape = 's32[1]{0}', space=sflag, size = 0x4, scoped, tag = 'scoped memory for modified_rnn_forward.1']
    #allocation6 [shape = 'u8[131072]{0}', space=vmem, size = 0x20000, scoped, tag = 'input window, operand 2, single buffered']
    #allocation7 [shape = 'u8[196608]{0}', space=vmem, size = 0x30000, scoped, tag = 'input window, operand 4, single buffered']
    #allocation8 [shape = 's32[1]{0}', space=sflag, size = 0x4, scoped, tag = 'scoped memory for modified_rnn_forward.1']
    %17 = vsyncpa [#allocation5], 0
    %18 = vsyncpa [#allocation4], 0
    %19 = vsyncpa [#allocation8], 0
    // Predicated region
    $region2: #{modified_rnn_forward.1} parent=1 // pred_check
      _
    $region3: #{modified_rnn_forward.1} parent=1 // pred_check_branch
      %21 = sbr.rel (0) target = $region5
    $region4: #{modified_rnn_forward.1} parent=1 // pred_region
      %s23 = ssub.s32 128, 128
      %24 = vsyncadd [#allocation5], %s23
      %s26 = sshll.u32 %s0, 4
      %s27 = int_to_ptr.vmem [resolvable:$true] %s26
      %29 = dma.vmem_to_smem %s27, 128, [#allocation3], [#allocation5]
    $region5: #{modified_rnn_forward.1} parent=1 // pred_fallthru
      _
    // Predicated region
    $region6: #{modified_rnn_forward.1} parent=1 // pred_check
      _
    $region7: #{modified_rnn_forward.1} parent=1 // pred_check_branch
      %31 = sbr.rel (0) target = $region9
    $region8: #{modified_rnn_forward.1} parent=1 // pred_region
      _
    $region9: #{modified_rnn_forward.1} parent=1 // pred_fallthru
      _
    // Predicated region
    $region10: #{modified_rnn_forward.1} parent=1 // pred_check
      _
    $region11: #{modified_rnn_forward.1} parent=1 // pred_check_branch
      %33 = sbr.rel (0) target = $region13
    $region12: #{modified_rnn_forward.1} parent=1 // pred_region
      %s35 = ssub.s32 4096, 4096
      %36 = vsyncadd [#allocation4], %s35
      %s37 = sshll.u32 [#allocation6], 4
      %s38 = int_to_ptr.vmem [resolvable:$true] %s37
      %43 = dma.hbm_to_vmem [thread:$0]  %s2, 4096, %s38, [#allocation4], 256, 256, 16
    $region13: #{modified_rnn_forward.1} parent=1 // pred_fallthru
      _
    // Predicated region
    $region14: #{modified_rnn_forward.1} parent=1 // pred_check
      _
    $region15: #{modified_rnn_forward.1} parent=1 // pred_check_branch
      %45 = sbr.rel (0) target = $region17
    $region16: #{modified_rnn_forward.1} parent=1 // pred_region
      _
    $region17: #{modified_rnn_forward.1} parent=1 // pred_fallthru
      _
    // Predicated region
    $region18: #{modified_rnn_forward.1} parent=1 // pred_check
      _
    $region19: #{modified_rnn_forward.1} parent=1 // pred_check_branch
      %47 = sbr.rel (0) target = $region21
    $region20: #{modified_rnn_forward.1} parent=1 // pred_region
      %s49 = ssub.s32 6144, 6144
      %50 = vsyncadd [#allocation8], %s49
      %s51 = sshll.u32 [#allocation7], 4
      %s52 = int_to_ptr.vmem [resolvable:$true] %s51
      %57 = dma.hbm_to_vmem [thread:$0]  %s4, 6144, %s52, [#allocation8], 256, 256, 16
    $region21: #{modified_rnn_forward.1} parent=1 // pred_fallthru
      _
    // Predicated region
    $region22: #{modified_rnn_forward.1} parent=1 // pred_check
      _
    $region23: #{modified_rnn_forward.1} parent=1 // pred_check_branch
      %59 = sbr.rel (0) target = $region25
    $region24: #{modified_rnn_forward.1} parent=1 // pred_region
      _
    $region25: #{modified_rnn_forward.1} parent=1 // pred_fallthru
      _
    // Predicated region
    $region26: #{modified_rnn_forward.1} parent=1 // pred_check
      _
    $region27: #{modified_rnn_forward.1} parent=1 // pred_check_branch
      %61 = sbr.rel (0) target = $region29
    $region28: #{modified_rnn_forward.1} parent=1 // pred_region
      _
    $region29: #{modified_rnn_forward.1} parent=1 // pred_fallthru
      _
    // Predicated region
    $region30: #{modified_rnn_forward.1} parent=1 // pred_check
      _
    $region31: #{modified_rnn_forward.1} parent=1 // pred_check_branch
      %63 = sbr.rel (0) target = $region33
    $region32: #{modified_rnn_forward.1} parent=1 // pred_region
      _
    $region33: #{modified_rnn_forward.1} parent=1 // pred_fallthru
      _
    // Predicated region
    $region34: #{modified_rnn_forward.1} parent=1 // pred_check
      _
    $region35: #{modified_rnn_forward.1} parent=1 // pred_check_branch
      %65 = sbr.rel (0) target = $region37
    $region36: #{modified_rnn_forward.1} parent=1 // pred_region
      _
    $region37: #{modified_rnn_forward.1} parent=1 // pred_fallthru
      _
    // Predicated region
    $region38: #{modified_rnn_forward.1} parent=1 // pred_check
      _
    $region39: #{modified_rnn_forward.1} parent=1 // pred_check_branch
      %67 = sbr.rel (0) target = $region41
    $region40: #{modified_rnn_forward.1} parent=1 // pred_region
      _
    $region41: #{modified_rnn_forward.1} parent=1 // pred_fallthru
      _
    // Predicated region
    $region42: #{modified_rnn_forward.1} parent=1 // pred_check
      _
    $region43: #{modified_rnn_forward.1} parent=1 // pred_check_branch
      %69 = sbr.rel (0) target = $region45
    $region44: #{modified_rnn_forward.1} parent=1 // pred_region
      %70 = dma.done [#allocation5], 128
    $region45: #{modified_rnn_forward.1} parent=1 // pred_fallthru
      _
    // Predicated region
    $region46: #{modified_rnn_forward.1} parent=1 // pred_check
      _
    $region47: #{modified_rnn_forward.1} parent=1 // pred_check_branch
      %72 = sbr.rel (0) target = $region49
    $region48: #{modified_rnn_forward.1} parent=1 // pred_region
      %73 = dma.done [#allocation4], 4096
    $region49: #{modified_rnn_forward.1} parent=1 // pred_fallthru
      _
    // Predicated region
    $region50: #{modified_rnn_forward.1} parent=1 // pred_check
      _
    $region51: #{modified_rnn_forward.1} parent=1 // pred_check_branch
      %75 = sbr.rel (0) target = $region53
    $region52: #{modified_rnn_forward.1} parent=1 // pred_region
      %76 = dma.done [#allocation8], 6144
    $region53: #{modified_rnn_forward.1} parent=1 // pred_fallthru
      _
    %77 = sfence
    %s78 = sld [smem:[#allocation3]]
    %s79 = scalar_lea.vmem %s1, %s78
    %v80 = vld [vmem:[%s79] sm:$0x1]
    %s81 = sld [smem:[#allocation3 + $0x1]]
    %s82 = scalar_lea.vmem %s1, %s81
    %v83 = vld [vmem:[%s82] sm:$0x1]
    %v85 = vlaneseq
    %v86 = vshrl.u32 %v85, 7
    %v87 = vsub.s32 0, %v86
    %v88 = vrot.slane %v83, %v87
    %vm90 = vcmask 1040384
    %v91 = vsel %vm90, %v80, %v88
    %s92 = sld [smem:[#allocation3 + $0x80]]
    %s93 = scalar_lea.vmem %s1, %s92
    %v94 = vld [vmem:[%s93] sm:$0x1]
    %s95 = sld [smem:[#allocation3 + $0x81]]
    %s96 = scalar_lea.vmem %s1, %s95
    %v97 = vld [vmem:[%s96] sm:$0x1]
    %v99 = vlaneseq
    %v100 = vshrl.u32 %v99, 7
    %v101 = vsub.s32 0, %v100
    %v102 = vrot.slane %v97, %v101
    %v104 = vsel %vm90, %v94, %v102
    %s105 = sld [smem:[#allocation3 + $0x100]]
    %s106 = scalar_lea.vmem %s1, %s105
    %v107 = vld [vmem:[%s106] sm:$0x1]
    %s108 = sld [smem:[#allocation3 + $0x101]]
    %s109 = scalar_lea.vmem %s1, %s108
    %v110 = vld [vmem:[%s109] sm:$0x1]
    %v112 = vlaneseq
    %v113 = vshrl.u32 %v112, 7
    %v114 = vsub.s32 0, %v113
    %v115 = vrot.slane %v110, %v114
    %v117 = vsel %vm90, %v107, %v115
    %s118 = sld [smem:[#allocation3 + $0x180]]
    %s119 = scalar_lea.vmem %s1, %s118
    %v120 = vld [vmem:[%s119] sm:$0x1]
    %s121 = sld [smem:[#allocation3 + $0x181]]
    %s122 = scalar_lea.vmem %s1, %s121
    %v123 = vld [vmem:[%s122] sm:$0x1]
    %v125 = vlaneseq
    %v126 = vshrl.u32 %v125, 7
    %v127 = vsub.s32 0, %v126
    %v128 = vrot.slane %v123, %v127
    %v130 = vsel %vm90, %v120, %v128
    %s131 = sld [smem:[#allocation3 + $0x200]]
    %s132 = scalar_lea.vmem %s1, %s131
    %v133 = vld [vmem:[%s132] sm:$0x1]
    %s134 = sld [smem:[#allocation3 + $0x201]]
    %s135 = scalar_lea.vmem %s1, %s134
    %v136 = vld [vmem:[%s135] sm:$0x1]
    %v138 = vlaneseq
    %v139 = vshrl.u32 %v138, 7
    %v140 = vsub.s32 0, %v139
    %v141 = vrot.slane %v136, %v140
    %v143 = vsel %vm90, %v133, %v141
    %s144 = sld [smem:[#allocation3 + $0x280]]
    %s145 = scalar_lea.vmem %s1, %s144
    %v146 = vld [vmem:[%s145] sm:$0x1]
    %s147 = sld [smem:[#allocation3 + $0x281]]
    %s148 = scalar_lea.vmem %s1, %s147
    %v149 = vld [vmem:[%s148] sm:$0x1]
    %v151 = vlaneseq
    %v152 = vshrl.u32 %v151, 7
    %v153 = vsub.s32 0, %v152
    %v154 = vrot.slane %v149, %v153
    %v156 = vsel %vm90, %v146, %v154
    %s157 = sld [smem:[#allocation3 + $0x300]]
    %s158 = scalar_lea.vmem %s1, %s157
    %v159 = vld [vmem:[%s158] sm:$0x1]
    %s160 = sld [smem:[#allocation3 + $0x301]]
    %s161 = scalar_lea.vmem %s1, %s160
    %v162 = vld [vmem:[%s161] sm:$0x1]
    %v164 = vlaneseq
    %v165 = vshrl.u32 %v164, 7
    %v166 = vsub.s32 0, %v165
    %v167 = vrot.slane %v162, %v166
    %v169 = vsel %vm90, %v159, %v167
    %s170 = sld [smem:[#allocation3 + $0x380]]
    %s171 = scalar_lea.vmem %s1, %s170
    %v172 = vld [vmem:[%s171] sm:$0x1]
    %s173 = sld [smem:[#allocation3 + $0x381]]
    %s174 = scalar_lea.vmem %s1, %s173
    %v175 = vld [vmem:[%s174] sm:$0x1]
    %v177 = vlaneseq
    %v178 = vshrl.u32 %v177, 7
    %v179 = vsub.s32 0, %v178
    %v180 = vrot.slane %v175, %v179
    %v182 = vsel %vm90, %v172, %v180
    %184 = vrot.lane.b32.xlu0 %v182, 64
    %v185 = vpop.permute.xlu0 %184
    %vm187 = vcmask 261120
    %v188 = vsel %vm187, %v91, 0.0
    %vm189 = vcmask 523264
    %v190 = vsel %vm189, %v188, %v185
    %vm191 = vcmask 785408
    %v192 = vsel %vm191, %v190, 0.0
    %v193 = vld [vmem:[#allocation6] sm:$0xff]
    %v194 = vld [vmem:[#allocation6 + $0x8] sm:$0xff]
    %v195 = vld [vmem:[#allocation6 + $0x10] sm:$0xff]
    %v196 = vld [vmem:[#allocation6 + $0x18] sm:$0xff]
    %v197 = vld [vmem:[#allocation6 + $0x20] sm:$0xff]
    %v198 = vld [vmem:[#allocation6 + $0x28] sm:$0xff]
    %v199 = vld [vmem:[#allocation6 + $0x30] sm:$0xff]
    %v200 = vld [vmem:[#allocation6 + $0x38] sm:$0xff]
    %v201 = vld [vmem:[#allocation6 + $0x40] sm:$0xff]
    %v202 = vld [vmem:[#allocation6 + $0x48] sm:$0xff]
    %v203 = vld [vmem:[#allocation6 + $0x50] sm:$0xff]
    %v204 = vld [vmem:[#allocation6 + $0x58] sm:$0xff]
    %v205 = vld [vmem:[#allocation6 + $0x60] sm:$0xff]
    %v206 = vld [vmem:[#allocation6 + $0x68] sm:$0xff]
    %v207 = vld [vmem:[#allocation6 + $0x70] sm:$0xff]
    %v208 = vld [vmem:[#allocation6 + $0x78] sm:$0xff]
    %v209 = vld [vmem:[#allocation6 + $0x80] sm:$0xff]
    %v210 = vld [vmem:[#allocation6 + $0x88] sm:$0xff]
    %v211 = vld [vmem:[#allocation6 + $0x90] sm:$0xff]
    %v212 = vld [vmem:[#allocation6 + $0x98] sm:$0xff]
    %v213 = vld [vmem:[#allocation6 + $0xa0] sm:$0xff]
    %v214 = vld [vmem:[#allocation6 + $0xa8] sm:$0xff]
    %v215 = vld [vmem:[#allocation6 + $0xb0] sm:$0xff]
    %v216 = vld [vmem:[#allocation6 + $0xb8] sm:$0xff]
    %v217 = vld [vmem:[#allocation6 + $0xc0] sm:$0xff]
    %v218 = vld [vmem:[#allocation6 + $0xc8] sm:$0xff]
    %v219 = vld [vmem:[#allocation6 + $0xd0] sm:$0xff]
    %v220 = vld [vmem:[#allocation6 + $0xd8] sm:$0xff]
    %v221 = vld [vmem:[#allocation6 + $0xe0] sm:$0xff]
    %v222 = vld [vmem:[#allocation6 + $0xe8] sm:$0xff]
    %v223 = vld [vmem:[#allocation6 + $0xf0] sm:$0xff]
    %v224 = vld [vmem:[#allocation6 + $0xf8] sm:$0xff]
    %v225 = vld [vmem:[%s3] sm:$0x3]
    %v227 = vlaneseq
    %v228 = vshrl.u32 %v227, 7
    %v229 = vsub.s32 0, %v228
    %v230 = vrot.slane %v225, %v229
    %v231 = vlaneseq
    %v232 = vshrl.u32 %v231, 7
    %v233 = vsub.s32 1, %v232
    %v234 = vrot.slane %v225, %v233
    %237 = vmatprep.subr.mxu0 %v194
    %238 = vmatpush1.msra.mxu0 %v193
    %239 = vmatprep.subr.mxu0 %v196
    %240 = vmatpush1.msra.mxu0 %v195
    %241 = vmatprep.subr.mxu0 %v198
    %242 = vmatpush1.msra.mxu0 %v197
    %243 = vmatprep.subr.mxu0 %v200
    %244 = vmatpush1.msra.mxu0 %v199
    %245 = vmatprep.subr.mxu0 %v202
    %246 = vmatpush1.msra.mxu0 %v201
    %247 = vmatprep.subr.mxu0 %v204
    %248 = vmatpush1.msra.mxu0 %v203
    %249 = vmatprep.subr.mxu0 %v206
    %250 = vmatpush1.msra.mxu0 %v205
    %251 = vmatprep.subr.mxu0 %v208
    %252 = vmatpush1.msra.mxu0 %v207
    %253 = vmatprep.subr.mxu0 %v210
    %254 = vmatpush1.msra.mxu0 %v209
    %255 = vmatprep.subr.mxu0 %v212
    %256 = vmatpush1.msra.mxu0 %v211
    %257 = vmatprep.subr.mxu0 %v214
    %258 = vmatpush1.msra.mxu0 %v213
    %259 = vmatprep.subr.mxu0 %v216
    %260 = vmatpush1.msra.mxu0 %v215
    %261 = vmatprep.subr.mxu0 %v218
    %262 = vmatpush1.msra.mxu0 %v217
    %263 = vmatprep.subr.mxu0 %v220
    %264 = vmatpush1.msra.mxu0 %v219
    %265 = vmatprep.subr.mxu0 %v222
    %266 = vmatpush1.msra.mxu0 %v221
    %267 = vmatprep.subr.mxu0 %v224
    %268 = vmatpush1.msra.mxu0 %v223
    %269 = vmatprep.subr.mxu0 0.0
    %270 = vmatpush1.msra.mxu0 0.0
    %271 = vmatprep.subr.mxu0 0.0
    %272 = vmatpush1.msra.mxu0 0.0
    %273 = vmatprep.subr.mxu0 0.0
    %274 = vmatpush1.msra.mxu0 0.0
    %275 = vmatprep.subr.mxu0 0.0
    %276 = vmatpush1.msra.mxu0 0.0
    %277 = vmatprep.subr.mxu0 0.0
    %278 = vmatpush1.msra.mxu0 0.0
    %279 = vmatprep.subr.mxu0 0.0
    %280 = vmatpush1.msra.mxu0 0.0
    %281 = vmatprep.subr.mxu0 0.0
    %282 = vmatpush1.msra.mxu0 0.0
    %283 = vmatprep.subr.mxu0 0.0
    %284 = vmatpush1.msra.mxu0 0.0
    %285 = vmatprep.subr.mxu0 0.0
    %286 = vmatpush1.msra.mxu0 0.0
    %287 = vmatprep.subr.mxu0 0.0
    %288 = vmatpush1.msra.mxu0 0.0
    %289 = vmatprep.subr.mxu0 0.0
    %290 = vmatpush1.msra.mxu0 0.0
    %291 = vmatprep.subr.mxu0 0.0
    %292 = vmatpush1.msra.mxu0 0.0
    %293 = vmatprep.subr.mxu0 0.0
    %294 = vmatpush1.msra.mxu0 0.0
    %295 = vmatprep.subr.mxu0 0.0
    %296 = vmatpush1.msra.mxu0 0.0
    %297 = vmatprep.subr.mxu0 0.0
    %298 = vmatpush1.msra.mxu0 0.0
    %299 = vmatprep.subr.mxu0 0.0
    %300 = vmatpush1.msra.mxu0 0.0
    %301 = vmatprep.mubr.f32.mxu0 0.0
    %302 = vmatmul.mubr.f32.gmra.mrb[0].mxu0 %v192
    %v303 = vpop.f32.mrb[0].mxu0
    %v304 = vadd.f32 %v230, %v303
    %v305 = vpop.f32.mrb[0].mxu0
    %v306 = vadd.f32 %v234, %v305
    %307 = vdwg.mxu0
    %v308 = vxor.u32 %v304, 2147483648
    %v309 = vxor.u32 %v306, 2147483648
    %v310 = vmul.f32 %v308, 1.442695
    %v311 = vpow.pop %v310
    %v312 = vmul.f32 %v309, 1.442695
    %v313 = vpow.pop %v312
    %v314 = vadd.f32 %v311, 1.0
    %v315 = vadd.f32 %v313, 1.0
    %v316 = vrcp.pop %v314
    %v317 = vmul.f32 1.0, %v316
    %v318 = vrcp.pop %v315
    %v319 = vmul.f32 1.0, %v318
    %v320 = vtanh.pop %v306
    %v321 = vmul.f32 %v317, 0.0
    %v322 = vmul.f32 %v317, %v320
    %324 = vrot.lane.b32.xlu0 %v322, 64
    %v325 = vpop.permute.xlu0 %324
    %v327 = vadd.f32 %v321, %v325
    %v328 = vtanh.pop %v327
    %v329 = vmul.f32 %v319, %v328
    %331 = vrot.lane.b32.xlu0 %v329, 96
    %v332 = vpop.permute.xlu0 %331
    %335 = vrot.lane.b32.xlu0 %v169, 64
    %v336 = vpop.permute.xlu0 %335
    %v338 = vsel %vm187, %v104, %v332
    %v339 = vsel %vm189, %v338, %v336
    %v340 = vsel %vm191, %v339, %v329
    %341 = vmatprep.subr.mxu0 %v194
    %342 = vmatpush1.msra.mxu0 %v193
    %343 = vmatprep.subr.mxu0 %v196
    %344 = vmatpush1.msra.mxu0 %v195
    %345 = vmatprep.subr.mxu0 %v198
    %346 = vmatpush1.msra.mxu0 %v197
    %347 = vmatprep.subr.mxu0 %v200
    %348 = vmatpush1.msra.mxu0 %v199
    %349 = vmatprep.subr.mxu0 %v202
    %350 = vmatpush1.msra.mxu0 %v201
    %351 = vmatprep.subr.mxu0 %v204
    %352 = vmatpush1.msra.mxu0 %v203
    %353 = vmatprep.subr.mxu0 %v206
    %354 = vmatpush1.msra.mxu0 %v205
    %355 = vmatprep.subr.mxu0 %v208
    %356 = vmatpush1.msra.mxu0 %v207
    %357 = vmatprep.subr.mxu0 %v210
    %358 = vmatpush1.msra.mxu0 %v209
    %359 = vmatprep.subr.mxu0 %v212
    %360 = vmatpush1.msra.mxu0 %v211
    %361 = vmatprep.subr.mxu0 %v214
    %362 = vmatpush1.msra.mxu0 %v213
    %363 = vmatprep.subr.mxu0 %v216
    %364 = vmatpush1.msra.mxu0 %v215
    %365 = vmatprep.subr.mxu0 %v218
    %366 = vmatpush1.msra.mxu0 %v217
    %367 = vmatprep.subr.mxu0 %v220
    %368 = vmatpush1.msra.mxu0 %v219
    %369 = vmatprep.subr.mxu0 %v222
    %370 = vmatpush1.msra.mxu0 %v221
    %371 = vmatprep.subr.mxu0 %v224
    %372 = vmatpush1.msra.mxu0 %v223
    %373 = vmatprep.subr.mxu0 0.0
    %374 = vmatpush1.msra.mxu0 0.0
    %375 = vmatprep.subr.mxu0 0.0
    %376 = vmatpush1.msra.mxu0 0.0
    %377 = vmatprep.subr.mxu0 0.0
    %378 = vmatpush1.msra.mxu0 0.0
    %379 = vmatprep.subr.mxu0 0.0
    %380 = vmatpush1.msra.mxu0 0.0
    %381 = vmatprep.subr.mxu0 0.0
    %382 = vmatpush1.msra.mxu0 0.0
    %383 = vmatprep.subr.mxu0 0.0
    %384 = vmatpush1.msra.mxu0 0.0
    %385 = vmatprep.subr.mxu0 0.0
    %386 = vmatpush1.msra.mxu0 0.0
    %387 = vmatprep.subr.mxu0 0.0
    %388 = vmatpush1.msra.mxu0 0.0
    %389 = vmatprep.subr.mxu0 0.0
    %390 = vmatpush1.msra.mxu0 0.0
    %391 = vmatprep.subr.mxu0 0.0
    %392 = vmatpush1.msra.mxu0 0.0
    %393 = vmatprep.subr.mxu0 0.0
    %394 = vmatpush1.msra.mxu0 0.0
    %395 = vmatprep.subr.mxu0 0.0
    %396 = vmatpush1.msra.mxu0 0.0
    %397 = vmatprep.subr.mxu0 0.0
    %398 = vmatpush1.msra.mxu0 0.0
    %399 = vmatprep.subr.mxu0 0.0
    %400 = vmatpush1.msra.mxu0 0.0
    %401 = vmatprep.subr.mxu0 0.0
    %402 = vmatpush1.msra.mxu0 0.0
    %403 = vmatprep.subr.mxu0 0.0
    %404 = vmatpush1.msra.mxu0 0.0
    %405 = vmatprep.mubr.f32.mxu0 0.0
    %406 = vmatmul.mubr.f32.gmra.mrb[0].mxu0 %v340
    %v407 = vpop.f32.mrb[0].mxu0
    %v408 = vadd.f32 %v230, %v407
    %v409 = vpop.f32.mrb[0].mxu0
    %v410 = vadd.f32 %v234, %v409
    %411 = vdwg.mxu0
    %v412 = vxor.u32 %v408, 2147483648
    %v413 = vxor.u32 %v410, 2147483648
    %v414 = vmul.f32 %v412, 1.442695
    %v415 = vpow.pop %v414
    %v416 = vmul.f32 %v413, 1.442695
    %v417 = vpow.pop %v416
    %v418 = vadd.f32 %v415, 1.0
    %v419 = vadd.f32 %v417, 1.0
    %v420 = vrcp.pop %v418
    %v421 = vmul.f32 1.0, %v420
    %v422 = vrcp.pop %v419
    %v423 = vmul.f32 1.0, %v422
    %v424 = vtanh.pop %v410
    %v425 = vmul.f32 %v421, %v327
    %v426 = vmul.f32 %v421, %v424
    %428 = vrot.lane.b32.xlu0 %v426, 64
    %v429 = vpop.permute.xlu0 %428
    %v431 = vadd.f32 %v425, %v429
    %v432 = vtanh.pop %v431
    %v433 = vmul.f32 %v423, %v432
    %435 = vrot.lane.b32.xlu0 %v433, 96
    %v436 = vpop.permute.xlu0 %435
    %439 = vrot.lane.b32.xlu0 %v156, 64
    %v440 = vpop.permute.xlu0 %439
    %v442 = vsel %vm187, %v117, %v436
    %v443 = vsel %vm189, %v442, %v440
    %v444 = vsel %vm191, %v443, %v433
    %445 = vmatprep.subr.mxu0 %v194
    %446 = vmatpush1.msra.mxu0 %v193
    %447 = vmatprep.subr.mxu0 %v196
    %448 = vmatpush1.msra.mxu0 %v195
    %449 = vmatprep.subr.mxu0 %v198
    %450 = vmatpush1.msra.mxu0 %v197
    %451 = vmatprep.subr.mxu0 %v200
    %452 = vmatpush1.msra.mxu0 %v199
    %453 = vmatprep.subr.mxu0 %v202
    %454 = vmatpush1.msra.mxu0 %v201
    %455 = vmatprep.subr.mxu0 %v204
    %456 = vmatpush1.msra.mxu0 %v203
    %457 = vmatprep.subr.mxu0 %v206
    %458 = vmatpush1.msra.mxu0 %v205
    %459 = vmatprep.subr.mxu0 %v208
    %460 = vmatpush1.msra.mxu0 %v207
    %461 = vmatprep.subr.mxu0 %v210
    %462 = vmatpush1.msra.mxu0 %v209
    %463 = vmatprep.subr.mxu0 %v212
    %464 = vmatpush1.msra.mxu0 %v211
    %465 = vmatprep.subr.mxu0 %v214
    %466 = vmatpush1.msra.mxu0 %v213
    %467 = vmatprep.subr.mxu0 %v216
    %468 = vmatpush1.msra.mxu0 %v215
    %469 = vmatprep.subr.mxu0 %v218
    %470 = vmatpush1.msra.mxu0 %v217
    %471 = vmatprep.subr.mxu0 %v220
    %472 = vmatpush1.msra.mxu0 %v219
    %473 = vmatprep.subr.mxu0 %v222
    %474 = vmatpush1.msra.mxu0 %v221
    %475 = vmatprep.subr.mxu0 %v224
    %476 = vmatpush1.msra.mxu0 %v223
    %477 = vmatprep.subr.mxu0 0.0
    %478 = vmatpush1.msra.mxu0 0.0
    %479 = vmatprep.subr.mxu0 0.0
    %480 = vmatpush1.msra.mxu0 0.0
    %481 = vmatprep.subr.mxu0 0.0
    %482 = vmatpush1.msra.mxu0 0.0
    %483 = vmatprep.subr.mxu0 0.0
    %484 = vmatpush1.msra.mxu0 0.0
    %485 = vmatprep.subr.mxu0 0.0
    %486 = vmatpush1.msra.mxu0 0.0
    %487 = vmatprep.subr.mxu0 0.0
    %488 = vmatpush1.msra.mxu0 0.0
    %489 = vmatprep.subr.mxu0 0.0
    %490 = vmatpush1.msra.mxu0 0.0
    %491 = vmatprep.subr.mxu0 0.0
    %492 = vmatpush1.msra.mxu0 0.0
    %493 = vmatprep.subr.mxu0 0.0
    %494 = vmatpush1.msra.mxu0 0.0
    %495 = vmatprep.subr.mxu0 0.0
    %496 = vmatpush1.msra.mxu0 0.0
    %497 = vmatprep.subr.mxu0 0.0
    %498 = vmatpush1.msra.mxu0 0.0
    %499 = vmatprep.subr.mxu0 0.0
    %500 = vmatpush1.msra.mxu0 0.0
    %501 = vmatprep.subr.mxu0 0.0
    %502 = vmatpush1.msra.mxu0 0.0
    %503 = vmatprep.subr.mxu0 0.0
    %504 = vmatpush1.msra.mxu0 0.0
    %505 = vmatprep.subr.mxu0 0.0
    %506 = vmatpush1.msra.mxu0 0.0
    %507 = vmatprep.subr.mxu0 0.0
    %508 = vmatpush1.msra.mxu0 0.0
    %509 = vmatprep.mubr.f32.mxu0 0.0
    %510 = vmatmul.mubr.f32.gmra.mrb[0].mxu0 %v444
    %v511 = vpop.f32.mrb[0].mxu0
    %v512 = vadd.f32 %v230, %v511
    %v513 = vpop.f32.mrb[0].mxu0
    %v514 = vadd.f32 %v234, %v513
    %515 = vdwg.mxu0
    %v516 = vxor.u32 %v512, 2147483648
    %v517 = vxor.u32 %v514, 2147483648
    %v518 = vmul.f32 %v516, 1.442695
    %v519 = vpow.pop %v518
    %v520 = vmul.f32 %v517, 1.442695
    %v521 = vpow.pop %v520
    %v522 = vadd.f32 %v519, 1.0
    %v523 = vadd.f32 %v521, 1.0
    %v524 = vrcp.pop %v522
    %v525 = vmul.f32 1.0, %v524
    %v526 = vrcp.pop %v523
    %v527 = vmul.f32 1.0, %v526
    %v528 = vtanh.pop %v514
    %v529 = vmul.f32 %v525, %v431
    %v530 = vmul.f32 %v525, %v528
    %532 = vrot.lane.b32.xlu0 %v530, 64
    %v533 = vpop.permute.xlu0 %532
    %v535 = vadd.f32 %v529, %v533
    %v536 = vtanh.pop %v535
    %v537 = vmul.f32 %v527, %v536
    %539 = vrot.lane.b32.xlu0 %v537, 96
    %v540 = vpop.permute.xlu0 %539
    %543 = vrot.lane.b32.xlu0 %v143, 64
    %v544 = vpop.permute.xlu0 %543
    %v546 = vsel %vm187, %v130, %v540
    %v547 = vsel %vm189, %v546, %v544
    %v548 = vsel %vm191, %v547, %v537
    %549 = vmatprep.subr.mxu0 %v194
    %550 = vmatpush1.msra.mxu0 %v193
    %551 = vmatprep.subr.mxu0 %v196
    %552 = vmatpush1.msra.mxu0 %v195
    %553 = vmatprep.subr.mxu0 %v198
    %554 = vmatpush1.msra.mxu0 %v197
    %555 = vmatprep.subr.mxu0 %v200
    %556 = vmatpush1.msra.mxu0 %v199
    %557 = vmatprep.subr.mxu0 %v202
    %558 = vmatpush1.msra.mxu0 %v201
    %559 = vmatprep.subr.mxu0 %v204
    %560 = vmatpush1.msra.mxu0 %v203
    %561 = vmatprep.subr.mxu0 %v206
    %562 = vmatpush1.msra.mxu0 %v205
    %563 = vmatprep.subr.mxu0 %v208
    %564 = vmatpush1.msra.mxu0 %v207
    %565 = vmatprep.subr.mxu0 %v210
    %566 = vmatpush1.msra.mxu0 %v209
    %567 = vmatprep.subr.mxu0 %v212
    %568 = vmatpush1.msra.mxu0 %v211
    %569 = vmatprep.subr.mxu0 %v214
    %570 = vmatpush1.msra.mxu0 %v213
    %571 = vmatprep.subr.mxu0 %v216
    %572 = vmatpush1.msra.mxu0 %v215
    %573 = vmatprep.subr.mxu0 %v218
    %574 = vmatpush1.msra.mxu0 %v217
    %575 = vmatprep.subr.mxu0 %v220
    %576 = vmatpush1.msra.mxu0 %v219
    %577 = vmatprep.subr.mxu0 %v222
    %578 = vmatpush1.msra.mxu0 %v221
    %579 = vmatprep.subr.mxu0 %v224
    %580 = vmatpush1.msra.mxu0 %v223
    %581 = vmatprep.subr.mxu0 0.0
    %582 = vmatpush1.msra.mxu0 0.0
    %583 = vmatprep.subr.mxu0 0.0
    %584 = vmatpush1.msra.mxu0 0.0
    %585 = vmatprep.subr.mxu0 0.0
    %586 = vmatpush1.msra.mxu0 0.0
    %587 = vmatprep.subr.mxu0 0.0
    %588 = vmatpush1.msra.mxu0 0.0
    %589 = vmatprep.subr.mxu0 0.0
    %590 = vmatpush1.msra.mxu0 0.0
    %591 = vmatprep.subr.mxu0 0.0
    %592 = vmatpush1.msra.mxu0 0.0
    %593 = vmatprep.subr.mxu0 0.0
    %594 = vmatpush1.msra.mxu0 0.0
    %595 = vmatprep.subr.mxu0 0.0
    %596 = vmatpush1.msra.mxu0 0.0
    %597 = vmatprep.subr.mxu0 0.0
    %598 = vmatpush1.msra.mxu0 0.0
    %599 = vmatprep.subr.mxu0 0.0
    %600 = vmatpush1.msra.mxu0 0.0
    %601 = vmatprep.subr.mxu0 0.0
    %602 = vmatpush1.msra.mxu0 0.0
    %603 = vmatprep.subr.mxu0 0.0
    %604 = vmatpush1.msra.mxu0 0.0
    %605 = vmatprep.subr.mxu0 0.0
    %606 = vmatpush1.msra.mxu0 0.0
    %607 = vmatprep.subr.mxu0 0.0
    %608 = vmatpush1.msra.mxu0 0.0
    %609 = vmatprep.subr.mxu0 0.0
    %610 = vmatpush1.msra.mxu0 0.0
    %611 = vmatprep.subr.mxu0 0.0
    %612 = vmatpush1.msra.mxu0 0.0
    %613 = vmatprep.mubr.f32.mxu0 0.0
    %614 = vmatmul.mubr.f32.gmra.mrb[0].mxu0 %v548
    %v615 = vpop.f32.mrb[0].mxu0
    %v616 = vadd.f32 %v230, %v615
    %v617 = vpop.f32.mrb[0].mxu0
    %v618 = vadd.f32 %v234, %v617
    %619 = vdwg.mxu0
    %v620 = vxor.u32 %v616, 2147483648
    %v621 = vxor.u32 %v618, 2147483648
    %v622 = vmul.f32 %v620, 1.442695
    %v623 = vpow.pop %v622
    %v624 = vmul.f32 %v621, 1.442695
    %v625 = vpow.pop %v624
    %v626 = vadd.f32 %v623, 1.0
    %v627 = vadd.f32 %v625, 1.0
    %v628 = vrcp.pop %v626
    %v629 = vmul.f32 1.0, %v628
    %v630 = vrcp.pop %v627
    %v631 = vmul.f32 1.0, %v630
    %v632 = vtanh.pop %v618
    %v633 = vmul.f32 %v629, %v535
    %v634 = vmul.f32 %v629, %v632
    %636 = vrot.lane.b32.xlu0 %v634, 64
    %v637 = vpop.permute.xlu0 %636
    %v639 = vadd.f32 %v633, %v637
    %v640 = vtanh.pop %v639
    %v641 = vmul.f32 %v631, %v640
    %643 = vrot.lane.b32.xlu0 %v641, 96
    %v644 = vpop.permute.xlu0 %643
    %647 = vrot.lane.b32.xlu0 %v130, 64
    %v648 = vpop.permute.xlu0 %647
    %v650 = vsel %vm187, %v143, %v644
    %v651 = vsel %vm189, %v650, %v648
    %v652 = vsel %vm191, %v651, %v641
    %653 = vmatprep.subr.mxu0 %v194
    %654 = vmatpush1.msra.mxu0 %v193
    %655 = vmatprep.subr.mxu0 %v196
    %656 = vmatpush1.msra.mxu0 %v195
    %657 = vmatprep.subr.mxu0 %v198
    %658 = vmatpush1.msra.mxu0 %v197
    %659 = vmatprep.subr.mxu0 %v200
    %660 = vmatpush1.msra.mxu0 %v199
    %661 = vmatprep.subr.mxu0 %v202
    %662 = vmatpush1.msra.mxu0 %v201
    %663 = vmatprep.subr.mxu0 %v204
    %664 = vmatpush1.msra.mxu0 %v203
    %665 = vmatprep.subr.mxu0 %v206
    %666 = vmatpush1.msra.mxu0 %v205
    %667 = vmatprep.subr.mxu0 %v208
    %668 = vmatpush1.msra.mxu0 %v207
    %669 = vmatprep.subr.mxu0 %v210
    %670 = vmatpush1.msra.mxu0 %v209
    %671 = vmatprep.subr.mxu0 %v212
    %672 = vmatpush1.msra.mxu0 %v211
    %673 = vmatprep.subr.mxu0 %v214
    %674 = vmatpush1.msra.mxu0 %v213
    %675 = vmatprep.subr.mxu0 %v216
    %676 = vmatpush1.msra.mxu0 %v215
    %677 = vmatprep.subr.mxu0 %v218
    %678 = vmatpush1.msra.mxu0 %v217
    %679 = vmatprep.subr.mxu0 %v220
    %680 = vmatpush1.msra.mxu0 %v219
    %681 = vmatprep.subr.mxu0 %v222
    %682 = vmatpush1.msra.mxu0 %v221
    %683 = vmatprep.subr.mxu0 %v224
    %684 = vmatpush1.msra.mxu0 %v223
    %685 = vmatprep.subr.mxu0 0.0
    %686 = vmatpush1.msra.mxu0 0.0
    %687 = vmatprep.subr.mxu0 0.0
    %688 = vmatpush1.msra.mxu0 0.0
    %689 = vmatprep.subr.mxu0 0.0
    %690 = vmatpush1.msra.mxu0 0.0
    %691 = vmatprep.subr.mxu0 0.0
    %692 = vmatpush1.msra.mxu0 0.0
    %693 = vmatprep.subr.mxu0 0.0
    %694 = vmatpush1.msra.mxu0 0.0
    %695 = vmatprep.subr.mxu0 0.0
    %696 = vmatpush1.msra.mxu0 0.0
    %697 = vmatprep.subr.mxu0 0.0
    %698 = vmatpush1.msra.mxu0 0.0
    %699 = vmatprep.subr.mxu0 0.0
    %700 = vmatpush1.msra.mxu0 0.0
    %701 = vmatprep.subr.mxu0 0.0
    %702 = vmatpush1.msra.mxu0 0.0
    %703 = vmatprep.subr.mxu0 0.0
    %704 = vmatpush1.msra.mxu0 0.0
    %705 = vmatprep.subr.mxu0 0.0
    %706 = vmatpush1.msra.mxu0 0.0
    %707 = vmatprep.subr.mxu0 0.0
    %708 = vmatpush1.msra.mxu0 0.0
    %709 = vmatprep.subr.mxu0 0.0
    %710 = vmatpush1.msra.mxu0 0.0
    %711 = vmatprep.subr.mxu0 0.0
    %712 = vmatpush1.msra.mxu0 0.0
    %713 = vmatprep.subr.mxu0 0.0
    %714 = vmatpush1.msra.mxu0 0.0
    %715 = vmatprep.subr.mxu0 0.0
    %716 = vmatpush1.msra.mxu0 0.0
    %717 = vmatprep.mubr.f32.mxu0 0.0
    %718 = vmatmul.mubr.f32.gmra.mrb[0].mxu0 %v652
    %v719 = vpop.f32.mrb[0].mxu0
    %v720 = vadd.f32 %v230, %v719
    %v721 = vpop.f32.mrb[0].mxu0
    %v722 = vadd.f32 %v234, %v721
    %723 = vdwg.mxu0
    %v724 = vxor.u32 %v720, 2147483648
    %v725 = vxor.u32 %v722, 2147483648
    %v726 = vmul.f32 %v724, 1.442695
    %v727 = vpow.pop %v726
    %v728 = vmul.f32 %v725, 1.442695
    %v729 = vpow.pop %v728
    %v730 = vadd.f32 %v727, 1.0
    %v731 = vadd.f32 %v729, 1.0
    %v732 = vrcp.pop %v730
    %v733 = vmul.f32 1.0, %v732
    %v734 = vrcp.pop %v731
    %v735 = vmul.f32 1.0, %v734
    %v736 = vtanh.pop %v722
    %v737 = vmul.f32 %v733, %v639
    %v738 = vmul.f32 %v733, %v736
    %740 = vrot.lane.b32.xlu0 %v738, 64
    %v741 = vpop.permute.xlu0 %740
    %v743 = vadd.f32 %v737, %v741
    %v744 = vtanh.pop %v743
    %v745 = vmul.f32 %v735, %v744
    %747 = vrot.lane.b32.xlu0 %v745, 96
    %v748 = vpop.permute.xlu0 %747
    %751 = vrot.lane.b32.xlu0 %v117, 64
    %v752 = vpop.permute.xlu0 %751
    %v754 = vsel %vm187, %v156, %v748
    %v755 = vsel %vm189, %v754, %v752
    %v756 = vsel %vm191, %v755, %v745
    %757 = vmatprep.subr.mxu0 %v194
    %758 = vmatpush1.msra.mxu0 %v193
    %759 = vmatprep.subr.mxu0 %v196
    %760 = vmatpush1.msra.mxu0 %v195
    %761 = vmatprep.subr.mxu0 %v198
    %762 = vmatpush1.msra.mxu0 %v197
    %763 = vmatprep.subr.mxu0 %v200
    %764 = vmatpush1.msra.mxu0 %v199
    %765 = vmatprep.subr.mxu0 %v202
    %766 = vmatpush1.msra.mxu0 %v201
    %767 = vmatprep.subr.mxu0 %v204
    %768 = vmatpush1.msra.mxu0 %v203
    %769 = vmatprep.subr.mxu0 %v206
    %770 = vmatpush1.msra.mxu0 %v205
    %771 = vmatprep.subr.mxu0 %v208
    %772 = vmatpush1.msra.mxu0 %v207
    %773 = vmatprep.subr.mxu0 %v210
    %774 = vmatpush1.msra.mxu0 %v209
    %775 = vmatprep.subr.mxu0 %v212
    %776 = vmatpush1.msra.mxu0 %v211
    %777 = vmatprep.subr.mxu0 %v214
    %778 = vmatpush1.msra.mxu0 %v213
    %779 = vmatprep.subr.mxu0 %v216
    %780 = vmatpush1.msra.mxu0 %v215
    %781 = vmatprep.subr.mxu0 %v218
    %782 = vmatpush1.msra.mxu0 %v217
    %783 = vmatprep.subr.mxu0 %v220
    %784 = vmatpush1.msra.mxu0 %v219
    %785 = vmatprep.subr.mxu0 %v222
    %786 = vmatpush1.msra.mxu0 %v221
    %787 = vmatprep.subr.mxu0 %v224
    %788 = vmatpush1.msra.mxu0 %v223
    %789 = vmatprep.subr.mxu0 0.0
    %790 = vmatpush1.msra.mxu0 0.0
    %791 = vmatprep.subr.mxu0 0.0
    %792 = vmatpush1.msra.mxu0 0.0
    %793 = vmatprep.subr.mxu0 0.0
    %794 = vmatpush1.msra.mxu0 0.0
    %795 = vmatprep.subr.mxu0 0.0
    %796 = vmatpush1.msra.mxu0 0.0
    %797 = vmatprep.subr.mxu0 0.0
    %798 = vmatpush1.msra.mxu0 0.0
    %799 = vmatprep.subr.mxu0 0.0
    %800 = vmatpush1.msra.mxu0 0.0
    %801 = vmatprep.subr.mxu0 0.0
    %802 = vmatpush1.msra.mxu0 0.0
    %803 = vmatprep.subr.mxu0 0.0
    %804 = vmatpush1.msra.mxu0 0.0
    %805 = vmatprep.subr.mxu0 0.0
    %806 = vmatpush1.msra.mxu0 0.0
    %807 = vmatprep.subr.mxu0 0.0
    %808 = vmatpush1.msra.mxu0 0.0
    %809 = vmatprep.subr.mxu0 0.0
    %810 = vmatpush1.msra.mxu0 0.0
    %811 = vmatprep.subr.mxu0 0.0
    %812 = vmatpush1.msra.mxu0 0.0
    %813 = vmatprep.subr.mxu0 0.0
    %814 = vmatpush1.msra.mxu0 0.0
    %815 = vmatprep.subr.mxu0 0.0
    %816 = vmatpush1.msra.mxu0 0.0
    %817 = vmatprep.subr.mxu0 0.0
    %818 = vmatpush1.msra.mxu0 0.0
    %819 = vmatprep.subr.mxu0 0.0
    %820 = vmatpush1.msra.mxu0 0.0
    %821 = vmatprep.mubr.f32.mxu0 0.0
    %822 = vmatmul.mubr.f32.gmra.mrb[0].mxu0 %v756
    %v823 = vpop.f32.mrb[0].mxu0
    %v824 = vadd.f32 %v230, %v823
    %v825 = vpop.f32.mrb[0].mxu0
    %v826 = vadd.f32 %v234, %v825
    %827 = vdwg.mxu0
    %v828 = vxor.u32 %v824, 2147483648
    %v829 = vxor.u32 %v826, 2147483648
    %v830 = vmul.f32 %v828, 1.442695
    %v831 = vpow.pop %v830
    %v832 = vmul.f32 %v829, 1.442695
    %v833 = vpow.pop %v832
    %v834 = vadd.f32 %v831, 1.0
    %v835 = vadd.f32 %v833, 1.0
    %v836 = vrcp.pop %v834
    %v837 = vmul.f32 1.0, %v836
    %v838 = vrcp.pop %v835
    %v839 = vmul.f32 1.0, %v838
    %v840 = vtanh.pop %v826
    %v841 = vmul.f32 %v837, %v743
    %v842 = vmul.f32 %v837, %v840
    %844 = vrot.lane.b32.xlu0 %v842, 64
    %v845 = vpop.permute.xlu0 %844
    %v847 = vadd.f32 %v841, %v845
    %v848 = vtanh.pop %v847
    %v849 = vmul.f32 %v839, %v848
    %851 = vrot.lane.b32.xlu0 %v849, 96
    %v852 = vpop.permute.xlu0 %851
    %855 = vrot.lane.b32.xlu0 %v104, 64
    %v856 = vpop.permute.xlu0 %855
    %v858 = vsel %vm187, %v169, %v852
    %v859 = vsel %vm189, %v858, %v856
    %v860 = vsel %vm191, %v859, %v849
    %861 = vmatprep.subr.mxu0 %v194
    %862 = vmatpush1.msra.mxu0 %v193
    %863 = vmatprep.subr.mxu0 %v196
    %864 = vmatpush1.msra.mxu0 %v195
    %865 = vmatprep.subr.mxu0 %v198
    %866 = vmatpush1.msra.mxu0 %v197
    %867 = vmatprep.subr.mxu0 %v200
    %868 = vmatpush1.msra.mxu0 %v199
    %869 = vmatprep.subr.mxu0 %v202
    %870 = vmatpush1.msra.mxu0 %v201
    %871 = vmatprep.subr.mxu0 %v204
    %872 = vmatpush1.msra.mxu0 %v203
    %873 = vmatprep.subr.mxu0 %v206
    %874 = vmatpush1.msra.mxu0 %v205
    %875 = vmatprep.subr.mxu0 %v208
    %876 = vmatpush1.msra.mxu0 %v207
    %877 = vmatprep.subr.mxu0 %v210
    %878 = vmatpush1.msra.mxu0 %v209
    %879 = vmatprep.subr.mxu0 %v212
    %880 = vmatpush1.msra.mxu0 %v211
    %881 = vmatprep.subr.mxu0 %v214
    %882 = vmatpush1.msra.mxu0 %v213
    %883 = vmatprep.subr.mxu0 %v216
    %884 = vmatpush1.msra.mxu0 %v215
    %885 = vmatprep.subr.mxu0 %v218
    %886 = vmatpush1.msra.mxu0 %v217
    %887 = vmatprep.subr.mxu0 %v220
    %888 = vmatpush1.msra.mxu0 %v219
    %889 = vmatprep.subr.mxu0 %v222
    %890 = vmatpush1.msra.mxu0 %v221
    %891 = vmatprep.subr.mxu0 %v224
    %892 = vmatpush1.msra.mxu0 %v223
    %893 = vmatprep.subr.mxu0 0.0
    %894 = vmatpush1.msra.mxu0 0.0
    %895 = vmatprep.subr.mxu0 0.0
    %896 = vmatpush1.msra.mxu0 0.0
    %897 = vmatprep.subr.mxu0 0.0
    %898 = vmatpush1.msra.mxu0 0.0
    %899 = vmatprep.subr.mxu0 0.0
    %900 = vmatpush1.msra.mxu0 0.0
    %901 = vmatprep.subr.mxu0 0.0
    %902 = vmatpush1.msra.mxu0 0.0
    %903 = vmatprep.subr.mxu0 0.0
    %904 = vmatpush1.msra.mxu0 0.0
    %905 = vmatprep.subr.mxu0 0.0
    %906 = vmatpush1.msra.mxu0 0.0
    %907 = vmatprep.subr.mxu0 0.0
    %908 = vmatpush1.msra.mxu0 0.0
    %909 = vmatprep.subr.mxu0 0.0
    %910 = vmatpush1.msra.mxu0 0.0
    %911 = vmatprep.subr.mxu0 0.0
    %912 = vmatpush1.msra.mxu0 0.0
    %913 = vmatprep.subr.mxu0 0.0
    %914 = vmatpush1.msra.mxu0 0.0
    %915 = vmatprep.subr.mxu0 0.0
    %916 = vmatpush1.msra.mxu0 0.0
    %917 = vmatprep.subr.mxu0 0.0
    %918 = vmatpush1.msra.mxu0 0.0
    %919 = vmatprep.subr.mxu0 0.0
    %920 = vmatpush1.msra.mxu0 0.0
    %921 = vmatprep.subr.mxu0 0.0
    %922 = vmatpush1.msra.mxu0 0.0
    %923 = vmatprep.subr.mxu0 0.0
    %924 = vmatpush1.msra.mxu0 0.0
    %925 = vmatprep.mubr.f32.mxu0 0.0
    %926 = vmatmul.mubr.f32.gmra.mrb[0].mxu0 %v860
    %v927 = vpop.f32.mrb[0].mxu0
    %v928 = vadd.f32 %v230, %v927
    %v929 = vpop.f32.mrb[0].mxu0
    %v930 = vadd.f32 %v234, %v929
    %931 = vdwg.mxu0
    %v932 = vxor.u32 %v928, 2147483648
    %v933 = vxor.u32 %v930, 2147483648
    %v934 = vmul.f32 %v932, 1.442695
    %v935 = vpow.pop %v934
    %v936 = vmul.f32 %v933, 1.442695
    %v937 = vpow.pop %v936
    %v938 = vadd.f32 %v935, 1.0
    %v939 = vadd.f32 %v937, 1.0
    %v940 = vrcp.pop %v938
    %v941 = vmul.f32 1.0, %v940
    %v942 = vrcp.pop %v939
    %v943 = vmul.f32 1.0, %v942
    %v944 = vtanh.pop %v930
    %v945 = vmul.f32 %v941, %v847
    %v946 = vmul.f32 %v941, %v944
    %948 = vrot.lane.b32.xlu0 %v946, 64
    %v949 = vpop.permute.xlu0 %948
    %v951 = vadd.f32 %v945, %v949
    %v952 = vtanh.pop %v951
    %v953 = vmul.f32 %v943, %v952
    %955 = vrot.lane.b32.xlu0 %v953, 96
    %v956 = vpop.permute.xlu0 %955
    %959 = vrot.lane.b32.xlu0 %v91, 64
    %v960 = vpop.permute.xlu0 %959
    %v962 = vsel %vm187, %v182, %v956
    %v963 = vsel %vm189, %v962, %v960
    %v964 = vsel %vm191, %v963, %v953
    %965 = vmatprep.subr.mxu0 %v194
    %966 = vmatpush1.msra.mxu0 %v193
    %967 = vmatprep.subr.mxu0 %v196
    %968 = vmatpush1.msra.mxu0 %v195
    %969 = vmatprep.subr.mxu0 %v198
    %970 = vmatpush1.msra.mxu0 %v197
    %971 = vmatprep.subr.mxu0 %v200
    %972 = vmatpush1.msra.mxu0 %v199
    %973 = vmatprep.subr.mxu0 %v202
    %974 = vmatpush1.msra.mxu0 %v201
    %975 = vmatprep.subr.mxu0 %v204
    %976 = vmatpush1.msra.mxu0 %v203
    %977 = vmatprep.subr.mxu0 %v206
    %978 = vmatpush1.msra.mxu0 %v205
    %979 = vmatprep.subr.mxu0 %v208
    %980 = vmatpush1.msra.mxu0 %v207
    %981 = vmatprep.subr.mxu0 %v210
    %982 = vmatpush1.msra.mxu0 %v209
    %983 = vmatprep.subr.mxu0 %v212
    %984 = vmatpush1.msra.mxu0 %v211
    %985 = vmatprep.subr.mxu0 %v214
    %986 = vmatpush1.msra.mxu0 %v213
    %987 = vmatprep.subr.mxu0 %v216
    %988 = vmatpush1.msra.mxu0 %v215
    %989 = vmatprep.subr.mxu0 %v218
    %990 = vmatpush1.msra.mxu0 %v217
    %991 = vmatprep.subr.mxu0 %v220
    %992 = vmatpush1.msra.mxu0 %v219
    %993 = vmatprep.subr.mxu0 %v222
    %994 = vmatpush1.msra.mxu0 %v221
    %995 = vmatprep.subr.mxu0 %v224
    %996 = vmatpush1.msra.mxu0 %v223
    %997 = vmatprep.subr.mxu0 0.0
    %998 = vmatpush1.msra.mxu0 0.0
    %999 = vmatprep.subr.mxu0 0.0
    %1000 = vmatpush1.msra.mxu0 0.0
    %1001 = vmatprep.subr.mxu0 0.0
    %1002 = vmatpush1.msra.mxu0 0.0
    %1003 = vmatprep.subr.mxu0 0.0
    %1004 = vmatpush1.msra.mxu0 0.0
    %1005 = vmatprep.subr.mxu0 0.0
    %1006 = vmatpush1.msra.mxu0 0.0
    %1007 = vmatprep.subr.mxu0 0.0
    %1008 = vmatpush1.msra.mxu0 0.0
    %1009 = vmatprep.subr.mxu0 0.0
    %1010 = vmatpush1.msra.mxu0 0.0
    %1011 = vmatprep.subr.mxu0 0.0
    %1012 = vmatpush1.msra.mxu0 0.0
    %1013 = vmatprep.subr.mxu0 0.0
    %1014 = vmatpush1.msra.mxu0 0.0
    %1015 = vmatprep.subr.mxu0 0.0
    %1016 = vmatpush1.msra.mxu0 0.0
    %1017 = vmatprep.subr.mxu0 0.0
    %1018 = vmatpush1.msra.mxu0 0.0
    %1019 = vmatprep.subr.mxu0 0.0
    %1020 = vmatpush1.msra.mxu0 0.0
    %1021 = vmatprep.subr.mxu0 0.0
    %1022 = vmatpush1.msra.mxu0 0.0
    %1023 = vmatprep.subr.mxu0 0.0
    %1024 = vmatpush1.msra.mxu0 0.0
    %1025 = vmatprep.subr.mxu0 0.0
    %1026 = vmatpush1.msra.mxu0 0.0
    %1027 = vmatprep.subr.mxu0 0.0
    %1028 = vmatpush1.msra.mxu0 0.0
    %1029 = vmatprep.mubr.f32.mxu0 0.0
    %1030 = vmatmul.mubr.f32.gmra.mrb[0].mxu0 %v964
    %v1031 = vpop.f32.mrb[0].mxu0
    %v1032 = vadd.f32 %v230, %v1031
    %v1033 = vpop.f32.mrb[0].mxu0
    %v1034 = vadd.f32 %v234, %v1033
    %1035 = vdwg.mxu0
    %v1036 = vxor.u32 %v1032, 2147483648
    %v1037 = vxor.u32 %v1034, 2147483648
    %v1038 = vmul.f32 %v1036, 1.442695
    %v1039 = vpow.pop %v1038
    %v1040 = vmul.f32 %v1037, 1.442695
    %v1041 = vpow.pop %v1040
    %v1042 = vadd.f32 %v1039, 1.0
    %v1043 = vadd.f32 %v1041, 1.0
    %v1044 = vrcp.pop %v1042
    %v1045 = vmul.f32 1.0, %v1044
    %v1046 = vrcp.pop %v1043
    %v1047 = vmul.f32 1.0, %v1046
    %v1048 = vtanh.pop %v1034
    %v1049 = vmul.f32 %v1045, %v951
    %v1050 = vmul.f32 %v1045, %v1048
    %1052 = vrot.lane.b32.xlu0 %v1050, 64
    %v1053 = vpop.permute.xlu0 %1052
    %v1055 = vadd.f32 %v1049, %v1053
    %v1056 = vtanh.pop %v1055
    %v1057 = vmul.f32 %v1047, %v1056
    %1058 = vrot.lane.b32.xlu0 %v329, 64
    %v1059 = vpop.permute.xlu0 %1058
    %1062 = vrot.lane.b32.xlu0 %v1057, 64
    %v1063 = vpop.permute.xlu0 %1062
    %v1065 = vsel %vm187, %v1059, %v1063
    %1066 = vrot.lane.b32.xlu0 %v433, 64
    %v1067 = vpop.permute.xlu0 %1066
    %1069 = vrot.lane.b32.xlu0 %v953, 64
    %v1070 = vpop.permute.xlu0 %1069
    %v1072 = vsel %vm187, %v1067, %v1070
    %1073 = vrot.lane.b32.xlu0 %v537, 64
    %v1074 = vpop.permute.xlu0 %1073
    %1076 = vrot.lane.b32.xlu0 %v849, 64
    %v1077 = vpop.permute.xlu0 %1076
    %v1079 = vsel %vm187, %v1074, %v1077
    %1080 = vrot.lane.b32.xlu0 %v641, 64
    %v1081 = vpop.permute.xlu0 %1080
    %1083 = vrot.lane.b32.xlu0 %v745, 64
    %v1084 = vpop.permute.xlu0 %1083
    %v1086 = vsel %vm187, %v1081, %v1084
    %v1087 = vsel %vm187, %v1084, %v1081
    %v1088 = vsel %vm187, %v1077, %v1074
    %v1089 = vsel %vm187, %v1070, %v1067
    %v1090 = vsel %vm187, %v1063, %v1059
    %1092 = vrot.lane.b32.xlu0 %v1090, 96
    %v1093 = vpop.permute.xlu0 %1092
    %v1095 = vsel %vm189, %v1065, 0.0
    %v1096 = vsel %vm191, %v1095, %v1093
    %v1097 = vsel %vm187, %v1093, 0.0
    %v1098 = vld [vmem:[#allocation7] sm:$0xff]
    %v1099 = vld [vmem:[#allocation7 + $0x8] sm:$0xff]
    %v1100 = vld [vmem:[#allocation7 + $0x10] sm:$0xff]
    %v1101 = vld [vmem:[#allocation7 + $0x18] sm:$0xff]
    %v1102 = vld [vmem:[#allocation7 + $0x20] sm:$0xff]
    %v1103 = vld [vmem:[#allocation7 + $0x28] sm:$0xff]
    %v1104 = vld [vmem:[#allocation7 + $0x30] sm:$0xff]
    %v1105 = vld [vmem:[#allocation7 + $0x38] sm:$0xff]
    %v1106 = vld [vmem:[#allocation7 + $0x40] sm:$0xff]
    %v1107 = vld [vmem:[#allocation7 + $0x48] sm:$0xff]
    %v1108 = vld [vmem:[#allocation7 + $0x50] sm:$0xff]
    %v1109 = vld [vmem:[#allocation7 + $0x58] sm:$0xff]
    %v1110 = vld [vmem:[#allocation7 + $0x60] sm:$0xff]
    %v1111 = vld [vmem:[#allocation7 + $0x68] sm:$0xff]
    %v1112 = vld [vmem:[#allocation7 + $0x70] sm:$0xff]
    %v1113 = vld [vmem:[#allocation7 + $0x78] sm:$0xff]
    %v1114 = vld [vmem:[#allocation7 + $0x80] sm:$0xff]
    %v1115 = vld [vmem:[#allocation7 + $0x88] sm:$0xff]
    %v1116 = vld [vmem:[#allocation7 + $0x90] sm:$0xff]
    %v1117 = vld [vmem:[#allocation7 + $0x98] sm:$0xff]
    %v1118 = vld [vmem:[#allocation7 + $0xa0] sm:$0xff]
    %v1119 = vld [vmem:[#allocation7 + $0xa8] sm:$0xff]
    %v1120 = vld [vmem:[#allocation7 + $0xb0] sm:$0xff]
    %v1121 = vld [vmem:[#allocation7 + $0xb8] sm:$0xff]
    %v1122 = vld [vmem:[#allocation7 + $0xc0] sm:$0xff]
    %v1123 = vld [vmem:[#allocation7 + $0xc8] sm:$0xff]
    %v1124 = vld [vmem:[#allocation7 + $0xd0] sm:$0xff]
    %v1125 = vld [vmem:[#allocation7 + $0xd8] sm:$0xff]
    %v1126 = vld [vmem:[#allocation7 + $0xe0] sm:$0xff]
    %v1127 = vld [vmem:[#allocation7 + $0xe8] sm:$0xff]
    %v1128 = vld [vmem:[#allocation7 + $0xf0] sm:$0xff]
    %v1129 = vld [vmem:[#allocation7 + $0xf8] sm:$0xff]
    %v1130 = vld [vmem:[#allocation7 + $0x100] sm:$0xff]
    %v1131 = vld [vmem:[#allocation7 + $0x108] sm:$0xff]
    %v1132 = vld [vmem:[#allocation7 + $0x110] sm:$0xff]
    %v1133 = vld [vmem:[#allocation7 + $0x118] sm:$0xff]
    %v1134 = vld [vmem:[#allocation7 + $0x120] sm:$0xff]
    %v1135 = vld [vmem:[#allocation7 + $0x128] sm:$0xff]
    %v1136 = vld [vmem:[#allocation7 + $0x130] sm:$0xff]
    %v1137 = vld [vmem:[#allocation7 + $0x138] sm:$0xff]
    %v1138 = vld [vmem:[#allocation7 + $0x140] sm:$0xff]
    %v1139 = vld [vmem:[#allocation7 + $0x148] sm:$0xff]
    %v1140 = vld [vmem:[#allocation7 + $0x150] sm:$0xff]
    %v1141 = vld [vmem:[#allocation7 + $0x158] sm:$0xff]
    %v1142 = vld [vmem:[#allocation7 + $0x160] sm:$0xff]
    %v1143 = vld [vmem:[#allocation7 + $0x168] sm:$0xff]
    %v1144 = vld [vmem:[#allocation7 + $0x170] sm:$0xff]
    %v1145 = vld [vmem:[#allocation7 + $0x178] sm:$0xff]
    %v1146 = vld [vmem:[%s5] sm:$0x3]
    %v1148 = vlaneseq
    %v1149 = vshrl.u32 %v1148, 7
    %v1150 = vsub.s32 0, %v1149
    %v1151 = vrot.slane %v1146, %v1150
    %v1152 = vlaneseq
    %v1153 = vshrl.u32 %v1152, 7
    %v1154 = vsub.s32 1, %v1153
    %v1155 = vrot.slane %v1146, %v1154
    %v1159 = vsel %vm189, %v1097, 0
    %1161 = vmatprep.subr.mxu0 %v1099
    %1162 = vmatpush1.msra.mxu0 %v1098
    %1163 = vmatprep.subr.mxu0 %v1101
    %1164 = vmatpush1.msra.mxu0 %v1100
    %1165 = vmatprep.subr.mxu0 %v1103
    %1166 = vmatpush1.msra.mxu0 %v1102
    %1167 = vmatprep.subr.mxu0 %v1105
    %1168 = vmatpush1.msra.mxu0 %v1104
    %1169 = vmatprep.subr.mxu0 %v1107
    %1170 = vmatpush1.msra.mxu0 %v1106
    %1171 = vmatprep.subr.mxu0 %v1109
    %1172 = vmatpush1.msra.mxu0 %v1108
    %1173 = vmatprep.subr.mxu0 %v1111
    %1174 = vmatpush1.msra.mxu0 %v1110
    %1175 = vmatprep.subr.mxu0 %v1113
    %1176 = vmatpush1.msra.mxu0 %v1112
    %1177 = vmatprep.subr.mxu0 %v1115
    %1178 = vmatpush1.msra.mxu0 %v1114
    %1179 = vmatprep.subr.mxu0 %v1117
    %1180 = vmatpush1.msra.mxu0 %v1116
    %1181 = vmatprep.subr.mxu0 %v1119
    %1182 = vmatpush1.msra.mxu0 %v1118
    %1183 = vmatprep.subr.mxu0 %v1121
    %1184 = vmatpush1.msra.mxu0 %v1120
    %1185 = vmatprep.subr.mxu0 %v1123
    %1186 = vmatpush1.msra.mxu0 %v1122
    %1187 = vmatprep.subr.mxu0 %v1125
    %1188 = vmatpush1.msra.mxu0 %v1124
    %1189 = vmatprep.subr.mxu0 %v1127
    %1190 = vmatpush1.msra.mxu0 %v1126
    %1191 = vmatprep.subr.mxu0 %v1129
    %1192 = vmatpush1.msra.mxu0 %v1128
    %1193 = vmatprep.subr.mxu0 %v1131
    %1194 = vmatpush1.msra.mxu0 %v1130
    %1195 = vmatprep.subr.mxu0 %v1133
    %1196 = vmatpush1.msra.mxu0 %v1132
    %1197 = vmatprep.subr.mxu0 %v1135
    %1198 = vmatpush1.msra.mxu0 %v1134
    %1199 = vmatprep.subr.mxu0 %v1137
    %1200 = vmatpush1.msra.mxu0 %v1136
    %1201 = vmatprep.subr.mxu0 %v1139
    %1202 = vmatpush1.msra.mxu0 %v1138
    %1203 = vmatprep.subr.mxu0 %v1141
    %1204 = vmatpush1.msra.mxu0 %v1140
    %1205 = vmatprep.subr.mxu0 %v1143
    %1206 = vmatpush1.msra.mxu0 %v1142
    %1207 = vmatprep.subr.mxu0 %v1145
    %1208 = vmatpush1.msra.mxu0 %v1144
    %1209 = vmatprep.subr.mxu0 0.0
    %1210 = vmatpush1.msra.mxu0 0.0
    %1211 = vmatprep.subr.mxu0 0.0
    %1212 = vmatpush1.msra.mxu0 0.0
    %1213 = vmatprep.subr.mxu0 0.0
    %1214 = vmatpush1.msra.mxu0 0.0
    %1215 = vmatprep.subr.mxu0 0.0
    %1216 = vmatpush1.msra.mxu0 0.0
    %1217 = vmatprep.subr.mxu0 0.0
    %1218 = vmatpush1.msra.mxu0 0.0
    %1219 = vmatprep.subr.mxu0 0.0
    %1220 = vmatpush1.msra.mxu0 0.0
    %1221 = vmatprep.subr.mxu0 0.0
    %1222 = vmatpush1.msra.mxu0 0.0
    %1223 = vmatprep.subr.mxu0 0.0
    %1224 = vmatpush1.msra.mxu0 0.0
    %1225 = vmatprep.mubr.f32.mxu0 %v1159
    %1226 = vmatmul.mubr.f32.gmra.mrb[0].mxu0 %v1096
    %v1227 = vpop.f32.mrb[0].mxu0
    %v1228 = vadd.f32 %v1151, %v1227
    %v1229 = vpop.f32.mrb[0].mxu0
    %v1230 = vadd.f32 %v1155, %v1229
    %1231 = vdwg.mxu0
    %v1232 = vxor.u32 %v1228, 2147483648
    %v1233 = vxor.u32 %v1230, 2147483648
    %v1234 = vmul.f32 %v1232, 1.442695
    %v1235 = vpow.pop %v1234
    %v1236 = vmul.f32 %v1233, 1.442695
    %v1237 = vpow.pop %v1236
    %v1238 = vadd.f32 %v1235, 1.0
    %v1239 = vadd.f32 %v1237, 1.0
    %v1240 = vrcp.pop %v1238
    %v1241 = vmul.f32 1.0, %v1240
    %v1242 = vrcp.pop %v1239
    %v1243 = vmul.f32 1.0, %v1242
    %v1244 = vtanh.pop %v1230
    %v1245 = vmul.f32 %v1241, 0.0
    %v1246 = vmul.f32 %v1241, %v1244
    %1248 = vrot.lane.b32.xlu0 %v1246, 64
    %v1249 = vpop.permute.xlu0 %1248
    %v1251 = vadd.f32 %v1245, %v1249
    %v1252 = vtanh.pop %v1251
    %v1253 = vmul.f32 %v1243, %v1252
    %1255 = vrot.lane.b32.xlu0 %v1089, 96
    %v1256 = vpop.permute.xlu0 %1255
    %1259 = vrot.lane.b32.xlu0 %v1253, 64
    %v1260 = vpop.permute.xlu0 %1259
    %v1262 = vsel %vm189, %v1072, %v1253
    %v1263 = vsel %vm191, %v1262, %v1256
    %v1264 = vsel %vm187, %v1256, %v1260
    %v1266 = vsel %vm189, %v1264, 0
    %1268 = vmatprep.subr.mxu0 %v1099
    %1269 = vmatpush1.msra.mxu0 %v1098
    %1270 = vmatprep.subr.mxu0 %v1101
    %1271 = vmatpush1.msra.mxu0 %v1100
    %1272 = vmatprep.subr.mxu0 %v1103
    %1273 = vmatpush1.msra.mxu0 %v1102
    %1274 = vmatprep.subr.mxu0 %v1105
    %1275 = vmatpush1.msra.mxu0 %v1104
    %1276 = vmatprep.subr.mxu0 %v1107
    %1277 = vmatpush1.msra.mxu0 %v1106
    %1278 = vmatprep.subr.mxu0 %v1109
    %1279 = vmatpush1.msra.mxu0 %v1108
    %1280 = vmatprep.subr.mxu0 %v1111
    %1281 = vmatpush1.msra.mxu0 %v1110
    %1282 = vmatprep.subr.mxu0 %v1113
    %1283 = vmatpush1.msra.mxu0 %v1112
    %1284 = vmatprep.subr.mxu0 %v1115
    %1285 = vmatpush1.msra.mxu0 %v1114
    %1286 = vmatprep.subr.mxu0 %v1117
    %1287 = vmatpush1.msra.mxu0 %v1116
    %1288 = vmatprep.subr.mxu0 %v1119
    %1289 = vmatpush1.msra.mxu0 %v1118
    %1290 = vmatprep.subr.mxu0 %v1121
    %1291 = vmatpush1.msra.mxu0 %v1120
    %1292 = vmatprep.subr.mxu0 %v1123
    %1293 = vmatpush1.msra.mxu0 %v1122
    %1294 = vmatprep.subr.mxu0 %v1125
    %1295 = vmatpush1.msra.mxu0 %v1124
    %1296 = vmatprep.subr.mxu0 %v1127
    %1297 = vmatpush1.msra.mxu0 %v1126
    %1298 = vmatprep.subr.mxu0 %v1129
    %1299 = vmatpush1.msra.mxu0 %v1128
    %1300 = vmatprep.subr.mxu0 %v1131
    %1301 = vmatpush1.msra.mxu0 %v1130
    %1302 = vmatprep.subr.mxu0 %v1133
    %1303 = vmatpush1.msra.mxu0 %v1132
    %1304 = vmatprep.subr.mxu0 %v1135
    %1305 = vmatpush1.msra.mxu0 %v1134
    %1306 = vmatprep.subr.mxu0 %v1137
    %1307 = vmatpush1.msra.mxu0 %v1136
    %1308 = vmatprep.subr.mxu0 %v1139
    %1309 = vmatpush1.msra.mxu0 %v1138
    %1310 = vmatprep.subr.mxu0 %v1141
    %1311 = vmatpush1.msra.mxu0 %v1140
    %1312 = vmatprep.subr.mxu0 %v1143
    %1313 = vmatpush1.msra.mxu0 %v1142
    %1314 = vmatprep.subr.mxu0 %v1145
    %1315 = vmatpush1.msra.mxu0 %v1144
    %1316 = vmatprep.subr.mxu0 0.0
    %1317 = vmatpush1.msra.mxu0 0.0
    %1318 = vmatprep.subr.mxu0 0.0
    %1319 = vmatpush1.msra.mxu0 0.0
    %1320 = vmatprep.subr.mxu0 0.0
    %1321 = vmatpush1.msra.mxu0 0.0
    %1322 = vmatprep.subr.mxu0 0.0
    %1323 = vmatpush1.msra.mxu0 0.0
    %1324 = vmatprep.subr.mxu0 0.0
    %1325 = vmatpush1.msra.mxu0 0.0
    %1326 = vmatprep.subr.mxu0 0.0
    %1327 = vmatpush1.msra.mxu0 0.0
    %1328 = vmatprep.subr.mxu0 0.0
    %1329 = vmatpush1.msra.mxu0 0.0
    %1330 = vmatprep.subr.mxu0 0.0
    %1331 = vmatpush1.msra.mxu0 0.0
    %1332 = vmatprep.mubr.f32.mxu0 %v1266
    %1333 = vmatmul.mubr.f32.gmra.mrb[0].mxu0 %v1263
    %v1334 = vpop.f32.mrb[0].mxu0
    %v1335 = vadd.f32 %v1151, %v1334
    %v1336 = vpop.f32.mrb[0].mxu0
    %v1337 = vadd.f32 %v1155, %v1336
    %1338 = vdwg.mxu0
    %v1339 = vxor.u32 %v1335, 2147483648
    %v1340 = vxor.u32 %v1337, 2147483648
    %v1341 = vmul.f32 %v1339, 1.442695
    %v1342 = vpow.pop %v1341
    %v1343 = vmul.f32 %v1340, 1.442695
    %v1344 = vpow.pop %v1343
    %v1345 = vadd.f32 %v1342, 1.0
    %v1346 = vadd.f32 %v1344, 1.0
    %v1347 = vrcp.pop %v1345
    %v1348 = vmul.f32 1.0, %v1347
    %v1349 = vrcp.pop %v1346
    %v1350 = vmul.f32 1.0, %v1349
    %v1351 = vtanh.pop %v1337
    %v1352 = vmul.f32 %v1348, %v1251
    %v1353 = vmul.f32 %v1348, %v1351
    %1355 = vrot.lane.b32.xlu0 %v1353, 64
    %v1356 = vpop.permute.xlu0 %1355
    %v1358 = vadd.f32 %v1352, %v1356
    %v1359 = vtanh.pop %v1358
    %v1360 = vmul.f32 %v1350, %v1359
    %1362 = vrot.lane.b32.xlu0 %v1088, 96
    %v1363 = vpop.permute.xlu0 %1362
    %1366 = vrot.lane.b32.xlu0 %v1360, 64
    %v1367 = vpop.permute.xlu0 %1366
    %v1369 = vsel %vm189, %v1079, %v1360
    %v1370 = vsel %vm191, %v1369, %v1363
    %v1371 = vsel %vm187, %v1363, %v1367
    %v1373 = vsel %vm189, %v1371, 0
    %1375 = vmatprep.subr.mxu0 %v1099
    %1376 = vmatpush1.msra.mxu0 %v1098
    %1377 = vmatprep.subr.mxu0 %v1101
    %1378 = vmatpush1.msra.mxu0 %v1100
    %1379 = vmatprep.subr.mxu0 %v1103
    %1380 = vmatpush1.msra.mxu0 %v1102
    %1381 = vmatprep.subr.mxu0 %v1105
    %1382 = vmatpush1.msra.mxu0 %v1104
    %1383 = vmatprep.subr.mxu0 %v1107
    %1384 = vmatpush1.msra.mxu0 %v1106
    %1385 = vmatprep.subr.mxu0 %v1109
    %1386 = vmatpush1.msra.mxu0 %v1108
    %1387 = vmatprep.subr.mxu0 %v1111
    %1388 = vmatpush1.msra.mxu0 %v1110
    %1389 = vmatprep.subr.mxu0 %v1113
    %1390 = vmatpush1.msra.mxu0 %v1112
    %1391 = vmatprep.subr.mxu0 %v1115
    %1392 = vmatpush1.msra.mxu0 %v1114
    %1393 = vmatprep.subr.mxu0 %v1117
    %1394 = vmatpush1.msra.mxu0 %v1116
    %1395 = vmatprep.subr.mxu0 %v1119
    %1396 = vmatpush1.msra.mxu0 %v1118
    %1397 = vmatprep.subr.mxu0 %v1121
    %1398 = vmatpush1.msra.mxu0 %v1120
    %1399 = vmatprep.subr.mxu0 %v1123
    %1400 = vmatpush1.msra.mxu0 %v1122
    %1401 = vmatprep.subr.mxu0 %v1125
    %1402 = vmatpush1.msra.mxu0 %v1124
    %1403 = vmatprep.subr.mxu0 %v1127
    %1404 = vmatpush1.msra.mxu0 %v1126
    %1405 = vmatprep.subr.mxu0 %v1129
    %1406 = vmatpush1.msra.mxu0 %v1128
    %1407 = vmatprep.subr.mxu0 %v1131
    %1408 = vmatpush1.msra.mxu0 %v1130
    %1409 = vmatprep.subr.mxu0 %v1133
    %1410 = vmatpush1.msra.mxu0 %v1132
    %1411 = vmatprep.subr.mxu0 %v1135
    %1412 = vmatpush1.msra.mxu0 %v1134
    %1413 = vmatprep.subr.mxu0 %v1137
    %1414 = vmatpush1.msra.mxu0 %v1136
    %1415 = vmatprep.subr.mxu0 %v1139
    %1416 = vmatpush1.msra.mxu0 %v1138
    %1417 = vmatprep.subr.mxu0 %v1141
    %1418 = vmatpush1.msra.mxu0 %v1140
    %1419 = vmatprep.subr.mxu0 %v1143
    %1420 = vmatpush1.msra.mxu0 %v1142
    %1421 = vmatprep.subr.mxu0 %v1145
    %1422 = vmatpush1.msra.mxu0 %v1144
    %1423 = vmatprep.subr.mxu0 0.0
    %1424 = vmatpush1.msra.mxu0 0.0
    %1425 = vmatprep.subr.mxu0 0.0
    %1426 = vmatpush1.msra.mxu0 0.0
    %1427 = vmatprep.subr.mxu0 0.0
    %1428 = vmatpush1.msra.mxu0 0.0
    %1429 = vmatprep.subr.mxu0 0.0
    %1430 = vmatpush1.msra.mxu0 0.0
    %1431 = vmatprep.subr.mxu0 0.0
    %1432 = vmatpush1.msra.mxu0 0.0
    %1433 = vmatprep.subr.mxu0 0.0
    %1434 = vmatpush1.msra.mxu0 0.0
    %1435 = vmatprep.subr.mxu0 0.0
    %1436 = vmatpush1.msra.mxu0 0.0
    %1437 = vmatprep.subr.mxu0 0.0
    %1438 = vmatpush1.msra.mxu0 0.0
    %1439 = vmatprep.mubr.f32.mxu0 %v1373
    %1440 = vmatmul.mubr.f32.gmra.mrb[0].mxu0 %v1370
    %v1441 = vpop.f32.mrb[0].mxu0
    %v1442 = vadd.f32 %v1151, %v1441
    %v1443 = vpop.f32.mrb[0].mxu0
    %v1444 = vadd.f32 %v1155, %v1443
    %1445 = vdwg.mxu0
    %v1446 = vxor.u32 %v1442, 2147483648
    %v1447 = vxor.u32 %v1444, 2147483648
    %v1448 = vmul.f32 %v1446, 1.442695
    %v1449 = vpow.pop %v1448
    %v1450 = vmul.f32 %v1447, 1.442695
    %v1451 = vpow.pop %v1450
    %v1452 = vadd.f32 %v1449, 1.0
    %v1453 = vadd.f32 %v1451, 1.0
    %v1454 = vrcp.pop %v1452
    %v1455 = vmul.f32 1.0, %v1454
    %v1456 = vrcp.pop %v1453
    %v1457 = vmul.f32 1.0, %v1456
    %v1458 = vtanh.pop %v1444
    %v1459 = vmul.f32 %v1455, %v1358
    %v1460 = vmul.f32 %v1455, %v1458
    %1462 = vrot.lane.b32.xlu0 %v1460, 64
    %v1463 = vpop.permute.xlu0 %1462
    %v1465 = vadd.f32 %v1459, %v1463
    %v1466 = vtanh.pop %v1465
    %v1467 = vmul.f32 %v1457, %v1466
    %1469 = vrot.lane.b32.xlu0 %v1087, 96
    %v1470 = vpop.permute.xlu0 %1469
    %1473 = vrot.lane.b32.xlu0 %v1467, 64
    %v1474 = vpop.permute.xlu0 %1473
    %v1476 = vsel %vm189, %v1086, %v1467
    %v1477 = vsel %vm191, %v1476, %v1470
    %v1478 = vsel %vm187, %v1470, %v1474
    %v1480 = vsel %vm189, %v1478, 0
    %1482 = vmatprep.subr.mxu0 %v1099
    %1483 = vmatpush1.msra.mxu0 %v1098
    %1484 = vmatprep.subr.mxu0 %v1101
    %1485 = vmatpush1.msra.mxu0 %v1100
    %1486 = vmatprep.subr.mxu0 %v1103
    %1487 = vmatpush1.msra.mxu0 %v1102
    %1488 = vmatprep.subr.mxu0 %v1105
    %1489 = vmatpush1.msra.mxu0 %v1104
    %1490 = vmatprep.subr.mxu0 %v1107
    %1491 = vmatpush1.msra.mxu0 %v1106
    %1492 = vmatprep.subr.mxu0 %v1109
    %1493 = vmatpush1.msra.mxu0 %v1108
    %1494 = vmatprep.subr.mxu0 %v1111
    %1495 = vmatpush1.msra.mxu0 %v1110
    %1496 = vmatprep.subr.mxu0 %v1113
    %1497 = vmatpush1.msra.mxu0 %v1112
    %1498 = vmatprep.subr.mxu0 %v1115
    %1499 = vmatpush1.msra.mxu0 %v1114
    %1500 = vmatprep.subr.mxu0 %v1117
    %1501 = vmatpush1.msra.mxu0 %v1116
    %1502 = vmatprep.subr.mxu0 %v1119
    %1503 = vmatpush1.msra.mxu0 %v1118
    %1504 = vmatprep.subr.mxu0 %v1121
    %1505 = vmatpush1.msra.mxu0 %v1120
    %1506 = vmatprep.subr.mxu0 %v1123
    %1507 = vmatpush1.msra.mxu0 %v1122
    %1508 = vmatprep.subr.mxu0 %v1125
    %1509 = vmatpush1.msra.mxu0 %v1124
    %1510 = vmatprep.subr.mxu0 %v1127
    %1511 = vmatpush1.msra.mxu0 %v1126
    %1512 = vmatprep.subr.mxu0 %v1129
    %1513 = vmatpush1.msra.mxu0 %v1128
    %1514 = vmatprep.subr.mxu0 %v1131
    %1515 = vmatpush1.msra.mxu0 %v1130
    %1516 = vmatprep.subr.mxu0 %v1133
    %1517 = vmatpush1.msra.mxu0 %v1132
    %1518 = vmatprep.subr.mxu0 %v1135
    %1519 = vmatpush1.msra.mxu0 %v1134
    %1520 = vmatprep.subr.mxu0 %v1137
    %1521 = vmatpush1.msra.mxu0 %v1136
    %1522 = vmatprep.subr.mxu0 %v1139
    %1523 = vmatpush1.msra.mxu0 %v1138
    %1524 = vmatprep.subr.mxu0 %v1141
    %1525 = vmatpush1.msra.mxu0 %v1140
    %1526 = vmatprep.subr.mxu0 %v1143
    %1527 = vmatpush1.msra.mxu0 %v1142
    %1528 = vmatprep.subr.mxu0 %v1145
    %1529 = vmatpush1.msra.mxu0 %v1144
    %1530 = vmatprep.subr.mxu0 0.0
    %1531 = vmatpush1.msra.mxu0 0.0
    %1532 = vmatprep.subr.mxu0 0.0
    %1533 = vmatpush1.msra.mxu0 0.0
    %1534 = vmatprep.subr.mxu0 0.0
    %1535 = vmatpush1.msra.mxu0 0.0
    %1536 = vmatprep.subr.mxu0 0.0
    %1537 = vmatpush1.msra.mxu0 0.0
    %1538 = vmatprep.subr.mxu0 0.0
    %1539 = vmatpush1.msra.mxu0 0.0
    %1540 = vmatprep.subr.mxu0 0.0
    %1541 = vmatpush1.msra.mxu0 0.0
    %1542 = vmatprep.subr.mxu0 0.0
    %1543 = vmatpush1.msra.mxu0 0.0
    %1544 = vmatprep.subr.mxu0 0.0
    %1545 = vmatpush1.msra.mxu0 0.0
    %1546 = vmatprep.mubr.f32.mxu0 %v1480
    %1547 = vmatmul.mubr.f32.gmra.mrb[0].mxu0 %v1477
    %v1548 = vpop.f32.mrb[0].mxu0
    %v1549 = vadd.f32 %v1151, %v1548
    %v1550 = vpop.f32.mrb[0].mxu0
    %v1551 = vadd.f32 %v1155, %v1550
    %1552 = vdwg.mxu0
    %v1553 = vxor.u32 %v1549, 2147483648
    %v1554 = vxor.u32 %v1551, 2147483648
    %v1555 = vmul.f32 %v1553, 1.442695
    %v1556 = vpow.pop %v1555
    %v1557 = vmul.f32 %v1554, 1.442695
    %v1558 = vpow.pop %v1557
    %v1559 = vadd.f32 %v1556, 1.0
    %v1560 = vadd.f32 %v1558, 1.0
    %v1561 = vrcp.pop %v1559
    %v1562 = vmul.f32 1.0, %v1561
    %v1563 = vrcp.pop %v1560
    %v1564 = vmul.f32 1.0, %v1563
    %v1565 = vtanh.pop %v1551
    %v1566 = vmul.f32 %v1562, %v1465
    %v1567 = vmul.f32 %v1562, %v1565
    %1569 = vrot.lane.b32.xlu0 %v1567, 64
    %v1570 = vpop.permute.xlu0 %1569
    %v1572 = vadd.f32 %v1566, %v1570
    %v1573 = vtanh.pop %v1572
    %v1574 = vmul.f32 %v1564, %v1573
    %1576 = vrot.lane.b32.xlu0 %v1086, 96
    %v1577 = vpop.permute.xlu0 %1576
    %1580 = vrot.lane.b32.xlu0 %v1574, 64
    %v1581 = vpop.permute.xlu0 %1580
    %v1583 = vsel %vm189, %v1087, %v1574
    %v1584 = vsel %vm191, %v1583, %v1577
    %v1585 = vsel %vm187, %v1577, %v1581
    %v1587 = vsel %vm189, %v1585, 0
    %1589 = vmatprep.subr.mxu0 %v1099
    %1590 = vmatpush1.msra.mxu0 %v1098
    %1591 = vmatprep.subr.mxu0 %v1101
    %1592 = vmatpush1.msra.mxu0 %v1100
    %1593 = vmatprep.subr.mxu0 %v1103
    %1594 = vmatpush1.msra.mxu0 %v1102
    %1595 = vmatprep.subr.mxu0 %v1105
    %1596 = vmatpush1.msra.mxu0 %v1104
    %1597 = vmatprep.subr.mxu0 %v1107
    %1598 = vmatpush1.msra.mxu0 %v1106
    %1599 = vmatprep.subr.mxu0 %v1109
    %1600 = vmatpush1.msra.mxu0 %v1108
    %1601 = vmatprep.subr.mxu0 %v1111
    %1602 = vmatpush1.msra.mxu0 %v1110
    %1603 = vmatprep.subr.mxu0 %v1113
    %1604 = vmatpush1.msra.mxu0 %v1112
    %1605 = vmatprep.subr.mxu0 %v1115
    %1606 = vmatpush1.msra.mxu0 %v1114
    %1607 = vmatprep.subr.mxu0 %v1117
    %1608 = vmatpush1.msra.mxu0 %v1116
    %1609 = vmatprep.subr.mxu0 %v1119
    %1610 = vmatpush1.msra.mxu0 %v1118
    %1611 = vmatprep.subr.mxu0 %v1121
    %1612 = vmatpush1.msra.mxu0 %v1120
    %1613 = vmatprep.subr.mxu0 %v1123
    %1614 = vmatpush1.msra.mxu0 %v1122
    %1615 = vmatprep.subr.mxu0 %v1125
    %1616 = vmatpush1.msra.mxu0 %v1124
    %1617 = vmatprep.subr.mxu0 %v1127
    %1618 = vmatpush1.msra.mxu0 %v1126
    %1619 = vmatprep.subr.mxu0 %v1129
    %1620 = vmatpush1.msra.mxu0 %v1128
    %1621 = vmatprep.subr.mxu0 %v1131
    %1622 = vmatpush1.msra.mxu0 %v1130
    %1623 = vmatprep.subr.mxu0 %v1133
    %1624 = vmatpush1.msra.mxu0 %v1132
    %1625 = vmatprep.subr.mxu0 %v1135
    %1626 = vmatpush1.msra.mxu0 %v1134
    %1627 = vmatprep.subr.mxu0 %v1137
    %1628 = vmatpush1.msra.mxu0 %v1136
    %1629 = vmatprep.subr.mxu0 %v1139
    %1630 = vmatpush1.msra.mxu0 %v1138
    %1631 = vmatprep.subr.mxu0 %v1141
    %1632 = vmatpush1.msra.mxu0 %v1140
    %1633 = vmatprep.subr.mxu0 %v1143
    %1634 = vmatpush1.msra.mxu0 %v1142
    %1635 = vmatprep.subr.mxu0 %v1145
    %1636 = vmatpush1.msra.mxu0 %v1144
    %1637 = vmatprep.subr.mxu0 0.0
    %1638 = vmatpush1.msra.mxu0 0.0
    %1639 = vmatprep.subr.mxu0 0.0
    %1640 = vmatpush1.msra.mxu0 0.0
    %1641 = vmatprep.subr.mxu0 0.0
    %1642 = vmatpush1.msra.mxu0 0.0
    %1643 = vmatprep.subr.mxu0 0.0
    %1644 = vmatpush1.msra.mxu0 0.0
    %1645 = vmatprep.subr.mxu0 0.0
    %1646 = vmatpush1.msra.mxu0 0.0
    %1647 = vmatprep.subr.mxu0 0.0
    %1648 = vmatpush1.msra.mxu0 0.0
    %1649 = vmatprep.subr.mxu0 0.0
    %1650 = vmatpush1.msra.mxu0 0.0
    %1651 = vmatprep.subr.mxu0 0.0
    %1652 = vmatpush1.msra.mxu0 0.0
    %1653 = vmatprep.mubr.f32.mxu0 %v1587
    %1654 = vmatmul.mubr.f32.gmra.mrb[0].mxu0 %v1584
    %v1655 = vpop.f32.mrb[0].mxu0
    %v1656 = vadd.f32 %v1151, %v1655
    %v1657 = vpop.f32.mrb[0].mxu0
    %v1658 = vadd.f32 %v1155, %v1657
    %1659 = vdwg.mxu0
    %v1660 = vxor.u32 %v1656, 2147483648
    %v1661 = vxor.u32 %v1658, 2147483648
    %v1662 = vmul.f32 %v1660, 1.442695
    %v1663 = vpow.pop %v1662
    %v1664 = vmul.f32 %v1661, 1.442695
    %v1665 = vpow.pop %v1664
    %v1666 = vadd.f32 %v1663, 1.0
    %v1667 = vadd.f32 %v1665, 1.0
    %v1668 = vrcp.pop %v1666
    %v1669 = vmul.f32 1.0, %v1668
    %v1670 = vrcp.pop %v1667
    %v1671 = vmul.f32 1.0, %v1670
    %v1672 = vtanh.pop %v1658
    %v1673 = vmul.f32 %v1669, %v1572
    %v1674 = vmul.f32 %v1669, %v1672
    %1676 = vrot.lane.b32.xlu0 %v1674, 64
    %v1677 = vpop.permute.xlu0 %1676
    %v1679 = vadd.f32 %v1673, %v1677
    %v1680 = vtanh.pop %v1679
    %v1681 = vmul.f32 %v1671, %v1680
    %1683 = vrot.lane.b32.xlu0 %v1079, 96
    %v1684 = vpop.permute.xlu0 %1683
    %1687 = vrot.lane.b32.xlu0 %v1681, 64
    %v1688 = vpop.permute.xlu0 %1687
    %v1690 = vsel %vm189, %v1088, %v1681
    %v1691 = vsel %vm191, %v1690, %v1684
    %v1692 = vsel %vm187, %v1684, %v1688
    %v1694 = vsel %vm189, %v1692, 0
    %1696 = vmatprep.subr.mxu0 %v1099
    %1697 = vmatpush1.msra.mxu0 %v1098
    %1698 = vmatprep.subr.mxu0 %v1101
    %1699 = vmatpush1.msra.mxu0 %v1100
    %1700 = vmatprep.subr.mxu0 %v1103
    %1701 = vmatpush1.msra.mxu0 %v1102
    %1702 = vmatprep.subr.mxu0 %v1105
    %1703 = vmatpush1.msra.mxu0 %v1104
    %1704 = vmatprep.subr.mxu0 %v1107
    %1705 = vmatpush1.msra.mxu0 %v1106
    %1706 = vmatprep.subr.mxu0 %v1109
    %1707 = vmatpush1.msra.mxu0 %v1108
    %1708 = vmatprep.subr.mxu0 %v1111
    %1709 = vmatpush1.msra.mxu0 %v1110
    %1710 = vmatprep.subr.mxu0 %v1113
    %1711 = vmatpush1.msra.mxu0 %v1112
    %1712 = vmatprep.subr.mxu0 %v1115
    %1713 = vmatpush1.msra.mxu0 %v1114
    %1714 = vmatprep.subr.mxu0 %v1117
    %1715 = vmatpush1.msra.mxu0 %v1116
    %1716 = vmatprep.subr.mxu0 %v1119
    %1717 = vmatpush1.msra.mxu0 %v1118
    %1718 = vmatprep.subr.mxu0 %v1121
    %1719 = vmatpush1.msra.mxu0 %v1120
    %1720 = vmatprep.subr.mxu0 %v1123
    %1721 = vmatpush1.msra.mxu0 %v1122
    %1722 = vmatprep.subr.mxu0 %v1125
    %1723 = vmatpush1.msra.mxu0 %v1124
    %1724 = vmatprep.subr.mxu0 %v1127
    %1725 = vmatpush1.msra.mxu0 %v1126
    %1726 = vmatprep.subr.mxu0 %v1129
    %1727 = vmatpush1.msra.mxu0 %v1128
    %1728 = vmatprep.subr.mxu0 %v1131
    %1729 = vmatpush1.msra.mxu0 %v1130
    %1730 = vmatprep.subr.mxu0 %v1133
    %1731 = vmatpush1.msra.mxu0 %v1132
    %1732 = vmatprep.subr.mxu0 %v1135
    %1733 = vmatpush1.msra.mxu0 %v1134
    %1734 = vmatprep.subr.mxu0 %v1137
    %1735 = vmatpush1.msra.mxu0 %v1136
    %1736 = vmatprep.subr.mxu0 %v1139
    %1737 = vmatpush1.msra.mxu0 %v1138
    %1738 = vmatprep.subr.mxu0 %v1141
    %1739 = vmatpush1.msra.mxu0 %v1140
    %1740 = vmatprep.subr.mxu0 %v1143
    %1741 = vmatpush1.msra.mxu0 %v1142
    %1742 = vmatprep.subr.mxu0 %v1145
    %1743 = vmatpush1.msra.mxu0 %v1144
    %1744 = vmatprep.subr.mxu0 0.0
    %1745 = vmatpush1.msra.mxu0 0.0
    %1746 = vmatprep.subr.mxu0 0.0
    %1747 = vmatpush1.msra.mxu0 0.0
    %1748 = vmatprep.subr.mxu0 0.0
    %1749 = vmatpush1.msra.mxu0 0.0
    %1750 = vmatprep.subr.mxu0 0.0
    %1751 = vmatpush1.msra.mxu0 0.0
    %1752 = vmatprep.subr.mxu0 0.0
    %1753 = vmatpush1.msra.mxu0 0.0
    %1754 = vmatprep.subr.mxu0 0.0
    %1755 = vmatpush1.msra.mxu0 0.0
    %1756 = vmatprep.subr.mxu0 0.0
    %1757 = vmatpush1.msra.mxu0 0.0
    %1758 = vmatprep.subr.mxu0 0.0
    %1759 = vmatpush1.msra.mxu0 0.0
    %1760 = vmatprep.mubr.f32.mxu0 %v1694
    %1761 = vmatmul.mubr.f32.gmra.mrb[0].mxu0 %v1691
    %v1762 = vpop.f32.mrb[0].mxu0
    %v1763 = vadd.f32 %v1151, %v1762
    %v1764 = vpop.f32.mrb[0].mxu0
    %v1765 = vadd.f32 %v1155, %v1764
    %1766 = vdwg.mxu0
    %v1767 = vxor.u32 %v1763, 2147483648
    %v1768 = vxor.u32 %v1765, 2147483648
    %v1769 = vmul.f32 %v1767, 1.442695
    %v1770 = vpow.pop %v1769
    %v1771 = vmul.f32 %v1768, 1.442695
    %v1772 = vpow.pop %v1771
    %v1773 = vadd.f32 %v1770, 1.0
    %v1774 = vadd.f32 %v1772, 1.0
    %v1775 = vrcp.pop %v1773
    %v1776 = vmul.f32 1.0, %v1775
    %v1777 = vrcp.pop %v1774
    %v1778 = vmul.f32 1.0, %v1777
    %v1779 = vtanh.pop %v1765
    %v1780 = vmul.f32 %v1776, %v1679
    %v1781 = vmul.f32 %v1776, %v1779
    %1783 = vrot.lane.b32.xlu0 %v1781, 64
    %v1784 = vpop.permute.xlu0 %1783
    %v1786 = vadd.f32 %v1780, %v1784
    %v1787 = vtanh.pop %v1786
    %v1788 = vmul.f32 %v1778, %v1787
    %1790 = vrot.lane.b32.xlu0 %v1072, 96
    %v1791 = vpop.permute.xlu0 %1790
    %1794 = vrot.lane.b32.xlu0 %v1788, 64
    %v1795 = vpop.permute.xlu0 %1794
    %v1797 = vsel %vm189, %v1089, %v1788
    %v1798 = vsel %vm191, %v1797, %v1791
    %v1799 = vsel %vm187, %v1791, %v1795
    %v1801 = vsel %vm189, %v1799, 0
    %1803 = vmatprep.subr.mxu0 %v1099
    %1804 = vmatpush1.msra.mxu0 %v1098
    %1805 = vmatprep.subr.mxu0 %v1101
    %1806 = vmatpush1.msra.mxu0 %v1100
    %1807 = vmatprep.subr.mxu0 %v1103
    %1808 = vmatpush1.msra.mxu0 %v1102
    %1809 = vmatprep.subr.mxu0 %v1105
    %1810 = vmatpush1.msra.mxu0 %v1104
    %1811 = vmatprep.subr.mxu0 %v1107
    %1812 = vmatpush1.msra.mxu0 %v1106
    %1813 = vmatprep.subr.mxu0 %v1109
    %1814 = vmatpush1.msra.mxu0 %v1108
    %1815 = vmatprep.subr.mxu0 %v1111
    %1816 = vmatpush1.msra.mxu0 %v1110
    %1817 = vmatprep.subr.mxu0 %v1113
    %1818 = vmatpush1.msra.mxu0 %v1112
    %1819 = vmatprep.subr.mxu0 %v1115
    %1820 = vmatpush1.msra.mxu0 %v1114
    %1821 = vmatprep.subr.mxu0 %v1117
    %1822 = vmatpush1.msra.mxu0 %v1116
    %1823 = vmatprep.subr.mxu0 %v1119
    %1824 = vmatpush1.msra.mxu0 %v1118
    %1825 = vmatprep.subr.mxu0 %v1121
    %1826 = vmatpush1.msra.mxu0 %v1120
    %1827 = vmatprep.subr.mxu0 %v1123
    %1828 = vmatpush1.msra.mxu0 %v1122
    %1829 = vmatprep.subr.mxu0 %v1125
    %1830 = vmatpush1.msra.mxu0 %v1124
    %1831 = vmatprep.subr.mxu0 %v1127
    %1832 = vmatpush1.msra.mxu0 %v1126
    %1833 = vmatprep.subr.mxu0 %v1129
    %1834 = vmatpush1.msra.mxu0 %v1128
    %1835 = vmatprep.subr.mxu0 %v1131
    %1836 = vmatpush1.msra.mxu0 %v1130
    %1837 = vmatprep.subr.mxu0 %v1133
    %1838 = vmatpush1.msra.mxu0 %v1132
    %1839 = vmatprep.subr.mxu0 %v1135
    %1840 = vmatpush1.msra.mxu0 %v1134
    %1841 = vmatprep.subr.mxu0 %v1137
    %1842 = vmatpush1.msra.mxu0 %v1136
    %1843 = vmatprep.subr.mxu0 %v1139
    %1844 = vmatpush1.msra.mxu0 %v1138
    %1845 = vmatprep.subr.mxu0 %v1141
    %1846 = vmatpush1.msra.mxu0 %v1140
    %1847 = vmatprep.subr.mxu0 %v1143
    %1848 = vmatpush1.msra.mxu0 %v1142
    %1849 = vmatprep.subr.mxu0 %v1145
    %1850 = vmatpush1.msra.mxu0 %v1144
    %1851 = vmatprep.subr.mxu0 0.0
    %1852 = vmatpush1.msra.mxu0 0.0
    %1853 = vmatprep.subr.mxu0 0.0
    %1854 = vmatpush1.msra.mxu0 0.0
    %1855 = vmatprep.subr.mxu0 0.0
    %1856 = vmatpush1.msra.mxu0 0.0
    %1857 = vmatprep.subr.mxu0 0.0
    %1858 = vmatpush1.msra.mxu0 0.0
    %1859 = vmatprep.subr.mxu0 0.0
    %1860 = vmatpush1.msra.mxu0 0.0
    %1861 = vmatprep.subr.mxu0 0.0
    %1862 = vmatpush1.msra.mxu0 0.0
    %1863 = vmatprep.subr.mxu0 0.0
    %1864 = vmatpush1.msra.mxu0 0.0
    %1865 = vmatprep.subr.mxu0 0.0
    %1866 = vmatpush1.msra.mxu0 0.0
    %1867 = vmatprep.mubr.f32.mxu0 %v1801
    %1868 = vmatmul.mubr.f32.gmra.mrb[0].mxu0 %v1798
    %v1869 = vpop.f32.mrb[0].mxu0
    %v1870 = vadd.f32 %v1151, %v1869
    %v1871 = vpop.f32.mrb[0].mxu0
    %v1872 = vadd.f32 %v1155, %v1871
    %1873 = vdwg.mxu0
    %v1874 = vxor.u32 %v1870, 2147483648
    %v1875 = vxor.u32 %v1872, 2147483648
    %v1876 = vmul.f32 %v1874, 1.442695
    %v1877 = vpow.pop %v1876
    %v1878 = vmul.f32 %v1875, 1.442695
    %v1879 = vpow.pop %v1878
    %v1880 = vadd.f32 %v1877, 1.0
    %v1881 = vadd.f32 %v1879, 1.0
    %v1882 = vrcp.pop %v1880
    %v1883 = vmul.f32 1.0, %v1882
    %v1884 = vrcp.pop %v1881
    %v1885 = vmul.f32 1.0, %v1884
    %v1886 = vtanh.pop %v1872
    %v1887 = vmul.f32 %v1883, %v1786
    %v1888 = vmul.f32 %v1883, %v1886
    %1890 = vrot.lane.b32.xlu0 %v1888, 64
    %v1891 = vpop.permute.xlu0 %1890
    %v1893 = vadd.f32 %v1887, %v1891
    %v1894 = vtanh.pop %v1893
    %v1895 = vmul.f32 %v1885, %v1894
    %1897 = vrot.lane.b32.xlu0 %v1065, 96
    %v1898 = vpop.permute.xlu0 %1897
    %1901 = vrot.lane.b32.xlu0 %v1895, 64
    %v1902 = vpop.permute.xlu0 %1901
    %v1904 = vsel %vm189, %v1090, %v1895
    %v1905 = vsel %vm191, %v1904, %v1898
    %v1906 = vsel %vm187, %v1898, %v1902
    %v1908 = vsel %vm189, %v1906, 0
    %1910 = vmatprep.subr.mxu0 %v1099
    %1911 = vmatpush1.msra.mxu0 %v1098
    %1912 = vmatprep.subr.mxu0 %v1101
    %1913 = vmatpush1.msra.mxu0 %v1100
    %1914 = vmatprep.subr.mxu0 %v1103
    %1915 = vmatpush1.msra.mxu0 %v1102
    %1916 = vmatprep.subr.mxu0 %v1105
    %1917 = vmatpush1.msra.mxu0 %v1104
    %1918 = vmatprep.subr.mxu0 %v1107
    %1919 = vmatpush1.msra.mxu0 %v1106
    %1920 = vmatprep.subr.mxu0 %v1109
    %1921 = vmatpush1.msra.mxu0 %v1108
    %1922 = vmatprep.subr.mxu0 %v1111
    %1923 = vmatpush1.msra.mxu0 %v1110
    %1924 = vmatprep.subr.mxu0 %v1113
    %1925 = vmatpush1.msra.mxu0 %v1112
    %1926 = vmatprep.subr.mxu0 %v1115
    %1927 = vmatpush1.msra.mxu0 %v1114
    %1928 = vmatprep.subr.mxu0 %v1117
    %1929 = vmatpush1.msra.mxu0 %v1116
    %1930 = vmatprep.subr.mxu0 %v1119
    %1931 = vmatpush1.msra.mxu0 %v1118
    %1932 = vmatprep.subr.mxu0 %v1121
    %1933 = vmatpush1.msra.mxu0 %v1120
    %1934 = vmatprep.subr.mxu0 %v1123
    %1935 = vmatpush1.msra.mxu0 %v1122
    %1936 = vmatprep.subr.mxu0 %v1125
    %1937 = vmatpush1.msra.mxu0 %v1124
    %1938 = vmatprep.subr.mxu0 %v1127
    %1939 = vmatpush1.msra.mxu0 %v1126
    %1940 = vmatprep.subr.mxu0 %v1129
    %1941 = vmatpush1.msra.mxu0 %v1128
    %1942 = vmatprep.subr.mxu0 %v1131
    %1943 = vmatpush1.msra.mxu0 %v1130
    %1944 = vmatprep.subr.mxu0 %v1133
    %1945 = vmatpush1.msra.mxu0 %v1132
    %1946 = vmatprep.subr.mxu0 %v1135
    %1947 = vmatpush1.msra.mxu0 %v1134
    %1948 = vmatprep.subr.mxu0 %v1137
    %1949 = vmatpush1.msra.mxu0 %v1136
    %1950 = vmatprep.subr.mxu0 %v1139
    %1951 = vmatpush1.msra.mxu0 %v1138
    %1952 = vmatprep.subr.mxu0 %v1141
    %1953 = vmatpush1.msra.mxu0 %v1140
    %1954 = vmatprep.subr.mxu0 %v1143
    %1955 = vmatpush1.msra.mxu0 %v1142
    %1956 = vmatprep.subr.mxu0 %v1145
    %1957 = vmatpush1.msra.mxu0 %v1144
    %1958 = vmatprep.subr.mxu0 0.0
    %1959 = vmatpush1.msra.mxu0 0.0
    %1960 = vmatprep.subr.mxu0 0.0
    %1961 = vmatpush1.msra.mxu0 0.0
    %1962 = vmatprep.subr.mxu0 0.0
    %1963 = vmatpush1.msra.mxu0 0.0
    %1964 = vmatprep.subr.mxu0 0.0
    %1965 = vmatpush1.msra.mxu0 0.0
    %1966 = vmatprep.subr.mxu0 0.0
    %1967 = vmatpush1.msra.mxu0 0.0
    %1968 = vmatprep.subr.mxu0 0.0
    %1969 = vmatpush1.msra.mxu0 0.0
    %1970 = vmatprep.subr.mxu0 0.0
    %1971 = vmatpush1.msra.mxu0 0.0
    %1972 = vmatprep.subr.mxu0 0.0
    %1973 = vmatpush1.msra.mxu0 0.0
    %1974 = vmatprep.mubr.f32.mxu0 %v1908
    %1975 = vmatmul.mubr.f32.gmra.mrb[0].mxu0 %v1905
    %v1976 = vpop.f32.mrb[0].mxu0
    %v1977 = vadd.f32 %v1151, %v1976
    %v1978 = vpop.f32.mrb[0].mxu0
    %v1979 = vadd.f32 %v1155, %v1978
    %1980 = vdwg.mxu0
    %v1981 = vxor.u32 %v1977, 2147483648
    %v1982 = vxor.u32 %v1979, 2147483648
    %v1983 = vmul.f32 %v1981, 1.442695
    %v1984 = vpow.pop %v1983
    %v1985 = vmul.f32 %v1982, 1.442695
    %v1986 = vpow.pop %v1985
    %v1987 = vadd.f32 %v1984, 1.0
    %v1988 = vadd.f32 %v1986, 1.0
    %v1989 = vrcp.pop %v1987
    %v1990 = vmul.f32 1.0, %v1989
    %v1991 = vrcp.pop %v1988
    %v1992 = vmul.f32 1.0, %v1991
    %v1993 = vtanh.pop %v1979
    %v1994 = vmul.f32 %v1990, %v1893
    %v1995 = vmul.f32 %v1990, %v1993
    %1997 = vrot.lane.b32.xlu0 %v1995, 64
    %v1998 = vpop.permute.xlu0 %1997
    %v2000 = vadd.f32 %v1994, %v1998
    %v2001 = vtanh.pop %v2000
    %v2002 = vmul.f32 %v1992, %v2001
    %v2003 = vld [vmem:[%s6] sm:$0xff]
    %v2004 = vld [vmem:[%s6 + $0x8] sm:$0xff]
    %v2005 = vld [vmem:[%s6 + $0x10] sm:$0xff]
    %v2006 = vld [vmem:[%s6 + $0x18] sm:$0xff]
    %v2007 = vld [vmem:[%s6 + $0x20] sm:$0xff]
    %v2008 = vld [vmem:[%s6 + $0x28] sm:$0xff]
    %v2009 = vld [vmem:[%s6 + $0x30] sm:$0xff]
    %v2010 = vld [vmem:[%s6 + $0x38] sm:$0xff]
    %v2011 = vld [vmem:[%s7] sm:$0x1]
    %v2013 = vlaneseq
    %v2014 = vshrl.u32 %v2013, 7
    %v2015 = vsub.s32 0, %v2014
    %v2016 = vrot.slane %v2011, %v2015
    %2019 = vrot.lane.b32.xlu0 %v2002, 64
    %v2020 = vpop.permute.xlu0 %2019
    %v2021 = vsel %vm189, %v2020, 0
    %2023 = vmatprep.subr.mxu0 0.0
    %2024 = vmatpush1.msra.mxu0 %v2003
    %2025 = vmatprep.subr.mxu0 0.0
    %2026 = vmatpush1.msra.mxu0 %v2004
    %2027 = vmatprep.subr.mxu0 0.0
    %2028 = vmatpush1.msra.mxu0 %v2005
    %2029 = vmatprep.subr.mxu0 0.0
    %2030 = vmatpush1.msra.mxu0 %v2006
    %2031 = vmatprep.subr.mxu0 0.0
    %2032 = vmatpush1.msra.mxu0 %v2007
    %2033 = vmatprep.subr.mxu0 0.0
    %2034 = vmatpush1.msra.mxu0 %v2008
    %2035 = vmatprep.subr.mxu0 0.0
    %2036 = vmatpush1.msra.mxu0 %v2009
    %2037 = vmatprep.subr.mxu0 0.0
    %2038 = vmatpush1.msra.mxu0 %v2010
    %2039 = vmatprep.subr.mxu0 0.0
    %2040 = vmatpush1.msra.mxu0 0.0
    %2041 = vmatprep.subr.mxu0 0.0
    %2042 = vmatpush1.msra.mxu0 0.0
    %2043 = vmatprep.subr.mxu0 0.0
    %2044 = vmatpush1.msra.mxu0 0.0
    %2045 = vmatprep.subr.mxu0 0.0
    %2046 = vmatpush1.msra.mxu0 0.0
    %2047 = vmatprep.subr.mxu0 0.0
    %2048 = vmatpush1.msra.mxu0 0.0
    %2049 = vmatprep.subr.mxu0 0.0
    %2050 = vmatpush1.msra.mxu0 0.0
    %2051 = vmatprep.subr.mxu0 0.0
    %2052 = vmatpush1.msra.mxu0 0.0
    %2053 = vmatprep.subr.mxu0 0.0
    %2054 = vmatpush1.msra.mxu0 0.0
    %2055 = vmatprep.subr.mxu0 0.0
    %2056 = vmatpush1.msra.mxu0 0.0
    %2057 = vmatprep.subr.mxu0 0.0
    %2058 = vmatpush1.msra.mxu0 0.0
    %2059 = vmatprep.subr.mxu0 0.0
    %2060 = vmatpush1.msra.mxu0 0.0
    %2061 = vmatprep.subr.mxu0 0.0
    %2062 = vmatpush1.msra.mxu0 0.0
    %2063 = vmatprep.subr.mxu0 0.0
    %2064 = vmatpush1.msra.mxu0 0.0
    %2065 = vmatprep.subr.mxu0 0.0
    %2066 = vmatpush1.msra.mxu0 0.0
    %2067 = vmatprep.subr.mxu0 0.0
    %2068 = vmatpush1.msra.mxu0 0.0
    %2069 = vmatprep.subr.mxu0 0.0
    %2070 = vmatpush1.msra.mxu0 0.0
    %2071 = vmatprep.subr.mxu0 0.0
    %2072 = vmatpush1.msra.mxu0 0.0
    %2073 = vmatprep.subr.mxu0 0.0
    %2074 = vmatpush1.msra.mxu0 0.0
    %2075 = vmatprep.subr.mxu0 0.0
    %2076 = vmatpush1.msra.mxu0 0.0
    %2077 = vmatprep.subr.mxu0 0.0
    %2078 = vmatpush1.msra.mxu0 0.0
    %2079 = vmatprep.subr.mxu0 0.0
    %2080 = vmatpush1.msra.mxu0 0.0
    %2081 = vmatprep.subr.mxu0 0.0
    %2082 = vmatpush1.msra.mxu0 0.0
    %2083 = vmatprep.subr.mxu0 0.0
    %2084 = vmatpush1.msra.mxu0 0.0
    %2085 = vmatprep.subr.mxu0 0.0
    %2086 = vmatpush1.msra.mxu0 0.0
    %2087 = vmatprep.mubr.f32.mxu0 0.0
    %2088 = vmatmul.mubr.f32.gmra.mrb[0].mxu0 %v2021
    %v2089 = vpop.f32.mrb[0].mxu0
    %v2090 = vadd.f32 %v2016, %v2089
    %v2091 = vpop.f32.mrb[0].mxu0
    %2092 = vdwg.mxu0
    %v2093 = vmax.f32 %v2090, 0.0
    %v2094 = vld [vmem:[%s8] sm:$0xff]
    %v2095 = vld [vmem:[%s8 + $0x8] sm:$0xff]
    %v2096 = vld [vmem:[%s8 + $0x10] sm:$0xff]
    %v2097 = vld [vmem:[%s8 + $0x18] sm:$0xff]
    %v2098 = vld [vmem:[#allocation2] sm:$0x1]
    %v2100 = vlaneseq
    %v2101 = vshrl.u32 %v2100, 7
    %v2102 = vsub.s32 0, %v2101
    %v2103 = vrot.slane %v2098, %v2102
    %v2106 = vsel %vm187, %v2093, 0
    %2108 = vmatprep.subr.mxu0 0.0
    %2109 = vmatpush1.msra.mxu0 %v2094
    %2110 = vmatprep.subr.mxu0 0.0
    %2111 = vmatpush1.msra.mxu0 %v2095
    %2112 = vmatprep.subr.mxu0 0.0
    %2113 = vmatpush1.msra.mxu0 %v2096
    %2114 = vmatprep.subr.mxu0 0.0
    %2115 = vmatpush1.msra.mxu0 %v2097
    %2116 = vmatprep.subr.mxu0 0.0
    %2117 = vmatpush1.msra.mxu0 0.0
    %2118 = vmatprep.subr.mxu0 0.0
    %2119 = vmatpush1.msra.mxu0 0.0
    %2120 = vmatprep.subr.mxu0 0.0
    %2121 = vmatpush1.msra.mxu0 0.0
    %2122 = vmatprep.subr.mxu0 0.0
    %2123 = vmatpush1.msra.mxu0 0.0
    %2124 = vmatprep.subr.mxu0 0.0
    %2125 = vmatpush1.msra.mxu0 0.0
    %2126 = vmatprep.subr.mxu0 0.0
    %2127 = vmatpush1.msra.mxu0 0.0
    %2128 = vmatprep.subr.mxu0 0.0
    %2129 = vmatpush1.msra.mxu0 0.0
    %2130 = vmatprep.subr.mxu0 0.0
    %2131 = vmatpush1.msra.mxu0 0.0
    %2132 = vmatprep.subr.mxu0 0.0
    %2133 = vmatpush1.msra.mxu0 0.0
    %2134 = vmatprep.subr.mxu0 0.0
    %2135 = vmatpush1.msra.mxu0 0.0
    %2136 = vmatprep.subr.mxu0 0.0
    %2137 = vmatpush1.msra.mxu0 0.0
    %2138 = vmatprep.subr.mxu0 0.0
    %2139 = vmatpush1.msra.mxu0 0.0
    %2140 = vmatprep.subr.mxu0 0.0
    %2141 = vmatpush1.msra.mxu0 0.0
    %2142 = vmatprep.subr.mxu0 0.0
    %2143 = vmatpush1.msra.mxu0 0.0
    %2144 = vmatprep.subr.mxu0 0.0
    %2145 = vmatpush1.msra.mxu0 0.0
    %2146 = vmatprep.subr.mxu0 0.0
    %2147 = vmatpush1.msra.mxu0 0.0
    %2148 = vmatprep.subr.mxu0 0.0
    %2149 = vmatpush1.msra.mxu0 0.0
    %2150 = vmatprep.subr.mxu0 0.0
    %2151 = vmatpush1.msra.mxu0 0.0
    %2152 = vmatprep.subr.mxu0 0.0
    %2153 = vmatpush1.msra.mxu0 0.0
    %2154 = vmatprep.subr.mxu0 0.0
    %2155 = vmatpush1.msra.mxu0 0.0
    %2156 = vmatprep.subr.mxu0 0.0
    %2157 = vmatpush1.msra.mxu0 0.0
    %2158 = vmatprep.subr.mxu0 0.0
    %2159 = vmatpush1.msra.mxu0 0.0
    %2160 = vmatprep.subr.mxu0 0.0
    %2161 = vmatpush1.msra.mxu0 0.0
    %2162 = vmatprep.subr.mxu0 0.0
    %2163 = vmatpush1.msra.mxu0 0.0
    %2164 = vmatprep.subr.mxu0 0.0
    %2165 = vmatpush1.msra.mxu0 0.0
    %2166 = vmatprep.subr.mxu0 0.0
    %2167 = vmatpush1.msra.mxu0 0.0
    %2168 = vmatprep.subr.mxu0 0.0
    %2169 = vmatpush1.msra.mxu0 0.0
    %2170 = vmatprep.subr.mxu0 0.0
    %2171 = vmatpush1.msra.mxu0 0.0
    %2172 = vmatprep.mubr.f32.mxu0 0.0
    %2173 = vmatmul.mubr.f32.gmra.mrb[0].mxu0 %v2106
    %v2174 = vpop.f32.mrb[0].mxu0
    %v2175 = vadd.f32 %v2103, %v2174
    %v2176 = vpop.f32.mrb[0].mxu0
    %2177 = vdwg.mxu0
    %vm2178 = vcmask 1024
    %2179 = vst.msk [vmem:[%s10] sm:$0x3] %vm2178, %v2175
    // Predicated region
    $region54: #{modified_rnn_forward.1} parent=1 // pred_check
      _
    $region55: #{modified_rnn_forward.1} parent=1 // pred_check_branch
      %2181 = sbr.rel (0) target = $region57
    $region56: #{modified_rnn_forward.1} parent=1 // pred_region
      _
    $region57: #{modified_rnn_forward.1} parent=1 // pred_fallthru
      _
    // Predicated region
    $region58: #{modified_rnn_forward.1} parent=1 // pred_check
      _
    $region59: #{modified_rnn_forward.1} parent=1 // pred_check_branch
      %2183 = sbr.rel (0) target = $region61
    $region60: #{modified_rnn_forward.1} parent=1 // pred_region
      _
    $region61: #{modified_rnn_forward.1} parent=1 // pred_fallthru
      _
    %2184 = vsyncpa [#allocation4], 1
    %2185 = vsyncpa [#allocation8], 1
    %2186 = vsyncpa [#allocation5], 1

</llo_original>
